<compile_context>
chip_gen: v7x
topology: tpu7x:2x2x1
jax: 0.10.0
libtpu: 0.0.40
codegen_flags: <defaults>
</compile_context>

<pallas_src>
import functools

import numpy as np
import jax
import jax.numpy as jnp
from jax import lax
from jax.experimental import pallas as pl
from jax.experimental.pallas import tpu as pltpu

_TWO_PI = 2.0 * np.pi


# ---------------------------------------------------------------------------
# Constant local upsample matrices (banded formulation), cached on static args.
# ---------------------------------------------------------------------------
@functools.lru_cache(maxsize=None)
def _local_upsample_matrices(f_blk: int, frame_length: int, sr: int):
    """Local matrices for one audio block of f_blk frames.

    With the frame signal edge-padded by one sample on each side, PyTorch's
    nn.Upsample(scale_factor=L, mode='linear', align_corners=False) becomes an
    un-clamped interpolation whose weights are identical for every audio block:
      audio[ai*f_blk*L + jj] = sum_r Wl[r, jj] * padded_frames[ai*f_blk + r]
    Returns (Wl, Wlc, rowsum):
      Wl    : (f_blk+2, f_blk*L) local upsample weights
      Wlc   : (f_blk+2, f_blk*L) cumsum(Wl, axis=1) * 2*pi/sr  (in-block phase)
      rowsum: (f_blk+2,)         Wl.sum(axis=1) (per-block phase increment weights)
    """
    L = frame_length
    a_blk = f_blk * L
    t_band = f_blk + 2
    jj = np.arange(a_blk, dtype=np.float64)
    s = (jj + 0.5) / L - 0.5                    # local source coord in (-0.5, f_blk - 0.5)
    i0 = np.floor(s).astype(np.int64)           # in [-1, f_blk - 1]
    lam = s - i0
    cols = np.arange(a_blk)
    wl = np.zeros((t_band, a_blk), np.float64)
    wl[i0 + 1, cols] += 1.0 - lam               # padded-local row of floor(src)
    wl[i0 + 2, cols] += lam                     # padded-local row of floor(src)+1
    wlc = np.cumsum(wl, axis=1) * (_TWO_PI / float(sr))
    rowsum = wl.sum(axis=1)
    return (jnp.asarray(wl, jnp.float32),
            jnp.asarray(wlc, jnp.float32),
            jnp.asarray(rowsum, jnp.float32))


def _make_upsample_matrix(t: int, frame_length: int) -> jnp.ndarray:
    """Dense (T, A) matrix matching torch.nn.Upsample(mode='linear', align_corners=False).

    Used only by the pure-JAX reference."""
    a = t * frame_length
    j = jnp.arange(a, dtype=jnp.float32)
    src = jnp.maximum((j + 0.5) / float(frame_length) - 0.5, 0.0)
    i0 = jnp.floor(src).astype(jnp.int32)
    lam = src - i0.astype(jnp.float32)
    i1 = jnp.minimum(i0 + 1, t - 1)
    cols = jnp.arange(a, dtype=jnp.int32)
    w = jnp.zeros((t, a), jnp.float32)
    w = w.at[i0, cols].add(1.0 - lam)
    w = w.at[i1, cols].add(lam)
    return w


# ---------------------------------------------------------------------------
# Tiling heuristics
# ---------------------------------------------------------------------------
def _pick_batch_block(b: int, p: int, target_rows: int = 512) -> int:
    """Batch rows per grid step; b_blk*p is the MXU M dim.

    Chosen so that b_blk == b (full extent, always legal) or b_blk % 8 == 0 (sublane
    alignment for the (b_blk, a_blk) output block and (b_blk*p, t_band) input blocks)."""
    if b * p <= target_rows:
        return b
    best = b  # fallback: full batch.  Per-row footprint is tiny in the banded formulation.
    d = 8
    while d < b:
        if b % d == 0 and d * p <= target_rows:
            best = d
        d += 8
    return best


def _pick_frame_block(t: int, frame_length: int, n_batch_blocks: int,
                      target_audio: int = 2048, min_grid_steps: int = 4) -> int:
    """Frames per audio block.  a_blk = f_blk*frame_length is kept a multiple of 128
    (lane-dense, unmasked output stores) unless it must cover the full audio length."""
    divs = [d for d in range(1, t + 1) if t % d == 0]
    lane_ok = [d for d in divs if (d * frame_length) % 128 == 0]
    if not lane_ok:
        return t  # single full-extent audio block (full-extent block shape is always legal)
    fitting = [d for d in lane_ok if d * frame_length <= target_audio]
    f_blk = max(fitting) if fitting else min(lane_ok)
    # Keep >= min_grid_steps total grid steps so both v7x TensorCores get >= 2 pipelined
    # steps each (no exposed DMA prologue/epilogue).
    while n_batch_blocks * (t // f_blk) < min_grid_steps:
        smaller = [d for d in lane_ok if d < f_blk]
        if not smaller:
            break
        f_blk = max(smaller)
    return f_blk


# ---------------------------------------------------------------------------
# Kernel
# ---------------------------------------------------------------------------
def _harmonic_osc_kernel(f0_ref, c_ref, loud_ref, off_ref, wl_ref, wlc_ref, o_ref,
                         *, partials):
    hi = lax.Precision.HIGHEST
    f0b = f0_ref[0]       # (m_blk, t_band)  fundamental * partial index (Hz)
    amps = c_ref[0]       # (m_blk, t_band)  anti-aliased harmonic amplitudes
    loud = loud_ref[0]    # (b_blk, t_band)  loudness * attenuate_gain
    off = off_ref[0]      # (m_blk, 1)       accumulated past phase (mod 2*pi)
    wl = wl_ref[...]      # (t_band, a_blk)  local upsample matrix (block-invariant)
    wlc = wlc_ref[...]    # (t_band, a_blk)  cumsum(local) * 2*pi/sr

    # K = t_band is tiny, so HIGHEST (pure f32) precision is almost free on the MXU;
    # the phase matmul genuinely needs it (bf16 passes -> O(rad) phase error).
    theta = jnp.dot(f0b, wlc, precision=hi, preferred_element_type=jnp.float32) + off
    aa = jnp.dot(amps, wl, precision=hi, preferred_element_type=jnp.float32)
    aloud = jnp.dot(loud, wl, precision=hi, preferred_element_type=jnp.float32)

    # Binding unit after the memory fixes is the VPU sin().
    sinus = jnp.sin(theta) * aa                                    # (m_blk, a_blk)
    m, a_blk = sinus.shape
    # Partial sum: sublane-group reduction; MXU/XLU have slack relative to sin().
    psum = jnp.sum(sinus.reshape(m // partials, partials, a_blk), axis=1)
    o_ref[...] = psum * aloud


# ---------------------------------------------------------------------------
# Wrapper
# ---------------------------------------------------------------------------
def harmonic_oscillator(f0, c, a, *, sr=16000, frame_length=64, attenuate_gain=0.02,
                        target_audio_block=2048, target_m_rows=512):
    """f0: (B, T), c: (B, P, T), a: (B, T) -> (B, T * frame_length)."""
    b, p, t = c.shape
    a_len = t * frame_length
    m_total = b * p

    # ---- tiling ----
    b_blk = _pick_batch_block(b, p, target_m_rows)
    nb = b // b_blk
    f_blk = _pick_frame_block(t, frame_length, nb, target_audio_block)
    na = t // f_blk
    a_blk = f_blk * frame_length
    t_band = f_blk + 2
    m_blk = b_blk * p

    # ---- constant local upsample matrices (cached on (f_blk, L, sr)) ----
    wl, wlc, rowsum = _local_upsample_matrices(f_blk, frame_length, int(sr))

    # ---- frame-rate prep, O(B*P*T) ----
    f0 = f0.astype(jnp.float32)
    c = c.astype(jnp.float32)
    a = a.astype(jnp.float32)
    partial = jnp.arange(1, p + 1, dtype=jnp.float32)
    f0_bank = f0[:, None, :] * partial[None, :, None]             # (B, P, T)
    mask = (f0_bank < sr * 0.5).astype(jnp.float32)
    f0_flat = f0_bank.reshape(m_total, t)
    c_flat = (c * mask).reshape(m_total, t)
    loud = a * jnp.float32(attenuate_gain)                        # (B, T)

    # Edge-replicate pad: turns PyTorch's clamped interpolation into un-clamped local
    # windows so the same tiny local matrix works for every audio block.
    def _pad_edge(x):
        return jnp.concatenate([x[:, :1], x, x[:, -1:]], axis=1)  # (R, T+2)

    # Banded windows: rows [ai*f_blk, ai*f_blk + t_band) of the padded frame data.
    win = (jnp.arange(na, dtype=jnp.int32)[:, None] * f_blk
           + jnp.arange(t_band, dtype=jnp.int32)[None, :])        # (na, t_band)

    def _band(x):                                                 # (R, T) -> (na, R, t_band)
        return jnp.transpose(_pad_edge(x)[:, win], (1, 0, 2))

    f0_band = _band(f0_flat)                                      # (na, B*P, t_band)
    c_band = _band(c_flat)                                        # (na, B*P, t_band)
    loud_band = _band(loud)                                       # (na, B,   t_band)

    # Phase accumulated by all *previous* audio blocks, per (row, block), wrapped mod 2*pi
    # (exact for sin; also bounds f32 phase error for long signals).
    blk_phase = jnp.sum(f0_band * rowsum[None, None, :], axis=-1) * jnp.float32(_TWO_PI / sr)
    blk_phase = jnp.mod(blk_phase, _TWO_PI)
    off = jnp.cumsum(blk_phase, axis=0) - blk_phase               # exclusive cumsum (na, B*P)
    off = jnp.mod(off, _TWO_PI).astype(jnp.float32)[:, :, None]   # (na, B*P, 1)

    kernel = functools.partial(_harmonic_osc_kernel, partials=p)
    out = pl.pallas_call(
        kernel,
        out_shape=jax.ShapeDtypeStruct((b, a_len), jnp.float32),
        grid_spec=pltpu.PrefetchScalarGridSpec(
            num_scalar_prefetch=0,
            grid=(na, nb),                                        # audio outer, batch inner
            in_specs=[
                pl.BlockSpec((1, m_blk, t_band), lambda ai, bi: (ai, bi, 0)),
                pl.BlockSpec((1, m_blk, t_band), lambda ai, bi: (ai, bi, 0)),
                pl.BlockSpec((1, b_blk, t_band), lambda ai, bi: (ai, bi, 0)),
                pl.BlockSpec((1, m_blk, 1), lambda ai, bi: (ai, bi, 0)),
                pl.BlockSpec((t_band, a_blk), lambda ai, bi: (0, 0)),   # resident constant
                pl.BlockSpec((t_band, a_blk), lambda ai, bi: (0, 0)),   # resident constant
            ],
            out_specs=pl.BlockSpec((b_blk, a_blk), lambda ai, bi: (bi, ai)),
        ),
        compiler_params=pltpu.CompilerParams(
            dimension_semantics=("parallel", "parallel")),
    )(f0_band, c_band, loud_band, off, wl, wlc)
    return out


# ---------------------------------------------------------------------------
# Pure-JAX reference mirroring the PyTorch forward
# ---------------------------------------------------------------------------
def _reference(f0, c, a, *, sr, frame_length, attenuate_gain):
    b, p, t = c.shape
    hi = lax.Precision.HIGHEST
    w = _make_upsample_matrix(t, frame_length)                    # (T, A)
    k = jnp.arange(1, p + 1, dtype=jnp.float32)[None, :, None]
    f0_bank = f0[:, None, :] * k
    mask = (f0_bank < sr / 2).astype(jnp.float32)
    c_anti = c * mask
    af0 = jnp.einsum('bpt,ta->bpa', f0_bank, w, precision=hi)
    phase = jnp.cumsum(af0 / sr, axis=-1)
    aa = jnp.einsum('bpt,ta->bpa', c_anti, w, precision=hi)
    sin_bank = jnp.sin(_TWO_PI * phase) * aa * attenuate_gain
    aloud = jnp.einsum('bt,ta->ba', a, w, precision=hi)
    return jnp.sum(sin_bank, axis=1) * aloud


if __name__ == "__main__":
    B, P, T, L = 2, 16, 8, 64     # batch, partials, frame-rate samples, frame_length
    SR, GAIN = 16000, 0.02

    key = jax.random.PRNGKey(0)
    k1, k2, k3 = jax.random.split(key, 3)
    f0 = jax.random.uniform(k1, (B, T), jnp.float32, minval=200.0, maxval=700.0)
    c = jax.random.uniform(k2, (B, P, T), jnp.float32)
    a = jax.random.uniform(k3, (B, T), jnp.float32)

    out = harmonic_oscillator(f0, c, a, sr=SR, frame_length=L, attenuate_gain=GAIN)
    out = jax.block_until_ready(out)
    assert out.shape == (B, T * L) and out.dtype == jnp.float32

    ref = _reference(f0, c, a, sr=SR, frame_length=L, attenuate_gain=GAIN)
    max_err = float(jnp.max(jnp.abs(out - ref)))
    assert max_err < 5e-3, f"max abs error too large: {max_err}"

    print("KERNEL_OK")
</pallas_src>

<mosaic_0001>
module attributes {stable_mosaic.version = 11 : i64} {
  func.func @_harmonic_osc_kernel(%arg0: i32, %arg1: i32, %arg2: memref<1x32x4xf32, #tpu.memory_space<vmem>>, %arg3: memref<1x32x4xf32, #tpu.memory_space<vmem>>, %arg4: memref<1x2x4xf32, #tpu.memory_space<vmem>>, %arg5: memref<1x32x1xf32, #tpu.memory_space<vmem>>, %arg6: memref<4x128xf32, #tpu.memory_space<vmem>>, %arg7: memref<4x128xf32, #tpu.memory_space<vmem>>, %arg8: memref<2x128xf32, #tpu.memory_space<vmem>>) attributes {dimension_semantics = [#tpu.dimension_semantics<parallel>, #tpu.dimension_semantics<parallel>], iteration_bounds = array<i64: 4, 1>, scalar_prefetch = 0 : i64, scratch_operands = 0 : i64, tpu.core_type = #tpu.core_type<tc>, window_params = [{transform_indices = @transform_0, window_bounds = array<i64: 1, 32, 4>}, {transform_indices = @transform_1, window_bounds = array<i64: 1, 32, 4>}, {transform_indices = @transform_2, window_bounds = array<i64: 1, 2, 4>}, {transform_indices = @transform_3, window_bounds = array<i64: 1, 32, 1>}, {pipeline_mode = #tpu.pipeline_mode<synchronous>, transform_indices = @transform_4, window_bounds = array<i64: 4, 128>}, {pipeline_mode = #tpu.pipeline_mode<synchronous>, transform_indices = @transform_5, window_bounds = array<i64: 4, 128>}, {transform_indices = @transform_6, window_bounds = array<i64: 2, 128>}]} {
    %c0 = arith.constant 0 : index
    %c0_0 = arith.constant 0 : index
    %c0_1 = arith.constant 0 : index
    %0 = vector.load %arg2[%c0, %c0_0, %c0_1] : memref<1x32x4xf32, #tpu.memory_space<vmem>>, vector<1x32x4xf32>
    %1 = vector.shape_cast %0 : vector<1x32x4xf32> to vector<32x4xf32>
    %c0_2 = arith.constant 0 : index
    %c0_3 = arith.constant 0 : index
    %c0_4 = arith.constant 0 : index
    %2 = vector.load %arg3[%c0_2, %c0_3, %c0_4] : memref<1x32x4xf32, #tpu.memory_space<vmem>>, vector<1x32x4xf32>
    %3 = vector.shape_cast %2 : vector<1x32x4xf32> to vector<32x4xf32>
    %c0_5 = arith.constant 0 : index
    %c0_6 = arith.constant 0 : index
    %c0_7 = arith.constant 0 : index
    %4 = vector.load %arg4[%c0_5, %c0_6, %c0_7] : memref<1x2x4xf32, #tpu.memory_space<vmem>>, vector<1x2x4xf32>
    %5 = vector.shape_cast %4 : vector<1x2x4xf32> to vector<2x4xf32>
    %c0_8 = arith.constant 0 : index
    %c0_9 = arith.constant 0 : index
    %c0_10 = arith.constant 0 : index
    %6 = vector.load %arg5[%c0_8, %c0_9, %c0_10] : memref<1x32x1xf32, #tpu.memory_space<vmem>>, vector<1x32x1xf32>
    %7 = vector.shape_cast %6 : vector<1x32x1xf32> to vector<32x1xf32>
    %c0_11 = arith.constant 0 : index
    %c0_12 = arith.constant 0 : index
    %8 = vector.load %arg6[%c0_11, %c0_12] : memref<4x128xf32, #tpu.memory_space<vmem>>, vector<4x128xf32>
    %c0_13 = arith.constant 0 : index
    %c0_14 = arith.constant 0 : index
    %9 = vector.load %arg7[%c0_13, %c0_14] : memref<4x128xf32, #tpu.memory_space<vmem>>, vector<4x128xf32>
    %cst = arith.constant dense<0.000000e+00> : vector<32x128xf32>
    %10 = tpu.matmul %1, %9, %cst {dimension_numbers = #tpu.dot_dimension_numbers<[1], [0], [0], [1], [0, 0, 1, 1], [], []>, precision = #tpu.contract_precision<fp32>} : vector<32x4xf32>, vector<4x128xf32>, vector<32x128xf32> -> vector<32x128xf32>
    %11 = vector.broadcast %7 : vector<32x1xf32> to vector<32x128xf32>
    %12 = arith.addf %10, %11 : vector<32x128xf32>
    %cst_15 = arith.constant dense<0.000000e+00> : vector<32x128xf32>
    %13 = tpu.matmul %3, %8, %cst_15 {dimension_numbers = #tpu.dot_dimension_numbers<[1], [0], [0], [1], [0, 0, 1, 1], [], []>, precision = #tpu.contract_precision<fp32>} : vector<32x4xf32>, vector<4x128xf32>, vector<32x128xf32> -> vector<32x128xf32>
    %cst_16 = arith.constant dense<0.000000e+00> : vector<2x128xf32>
    %14 = tpu.matmul %5, %8, %cst_16 {dimension_numbers = #tpu.dot_dimension_numbers<[1], [0], [0], [1], [0, 0, 1, 1], [], []>, precision = #tpu.contract_precision<fp32>} : vector<2x4xf32>, vector<4x128xf32>, vector<2x128xf32> -> vector<2x128xf32>
    %15 = math.sin %12 : vector<32x128xf32>
    %16 = arith.mulf %15, %13 : vector<32x128xf32>
    %17 = vector.shape_cast %16 : vector<32x128xf32> to vector<2x16x128xf32>
    %cst_17 = arith.constant dense<0.000000e+00> : vector<2x128xf32>
    %18 = vector.multi_reduction <add>, %17, %cst_17 [1] : vector<2x16x128xf32> to vector<2x128xf32>
    %19 = arith.mulf %18, %14 : vector<2x128xf32>
    %c0_18 = arith.constant 0 : index
    %c0_19 = arith.constant 0 : index
    %20 = vector.load %arg8[%c0_18, %c0_19] : memref<2x128xf32, #tpu.memory_space<vmem>>, vector<2x128xf32>
    tpu.vector_store %arg8[%c0_18, %c0_19], %19 {strides = array<i32>} : memref<2x128xf32, #tpu.memory_space<vmem>>, vector<2x128xf32>,
    return
  }
  func.func @transform_0(%arg0: i32, %arg1: i32) -> (i32, i32, i32) {
    %c0_i32 = arith.constant 0 : i32
    %c0_i32_0 = arith.constant 0 : i32
    return %arg0, %arg1, %c0_i32 : i32, i32, i32
  }
  func.func @transform_1(%arg0: i32, %arg1: i32) -> (i32, i32, i32) {
    %c0_i32 = arith.constant 0 : i32
    %c0_i32_0 = arith.constant 0 : i32
    return %arg0, %arg1, %c0_i32 : i32, i32, i32
  }
  func.func @transform_2(%arg0: i32, %arg1: i32) -> (i32, i32, i32) {
    %c0_i32 = arith.constant 0 : i32
    %c0_i32_0 = arith.constant 0 : i32
    return %arg0, %arg1, %c0_i32 : i32, i32, i32
  }
  func.func @transform_3(%arg0: i32, %arg1: i32) -> (i32, i32, i32) {
    %c0_i32 = arith.constant 0 : i32
    %c0_i32_0 = arith.constant 0 : i32
    return %arg0, %arg1, %c0_i32 : i32, i32, i32
  }
  func.func @transform_4(%arg0: i32, %arg1: i32) -> (i32, i32) {
    %c0_i32 = arith.constant 0 : i32
    %c0_i32_0 = arith.constant 0 : i32
    %c0_i32_1 = arith.constant 0 : i32
    return %c0_i32, %c0_i32_0 : i32, i32
  }
  func.func @transform_5(%arg0: i32, %arg1: i32) -> (i32, i32) {
    %c0_i32 = arith.constant 0 : i32
    %c0_i32_0 = arith.constant 0 : i32
    %c0_i32_1 = arith.constant 0 : i32
    return %c0_i32, %c0_i32_0 : i32, i32
  }
  func.func @transform_6(%arg0: i32, %arg1: i32) -> (i32, i32) {
    %c0_i32 = arith.constant 0 : i32
    return %arg1, %arg0 : i32, i32
  }
}

</mosaic_0001>

<llo_original>
// kernel: tpu_custom_call.1
$region0: #{tpu_custom_call.1}
  #allocation0 [shape = 'u32[]', space=smem, size = 0x4, offset = 0x4, fixed_abs, tag = 'smem constant byte address 0x4 - core index']
  #allocation1 [shape = 'u32[144,128]{1,0:T(1,128)}', space=vmem, size = 0x12000, scoped, tag = 'internal scratch']
  %s0 = inlined_call_operand.vmem [shape: f32[4,32,4], index: 0, kind: input, shape index: {}]
  %s1 = inlined_call_operand.vmem [shape: f32[4,32,4], index: 1, kind: input, shape index: {}]
  %s2 = inlined_call_operand.vmem [shape: f32[4,2,4], index: 2, kind: input, shape index: {}]
  %s3 = inlined_call_operand.vmem [shape: f32[4,32,1], index: 3, kind: input, shape index: {}]
  %s4 = inlined_call_operand.vmem [shape: f32[4,128], index: 4, kind: input, shape index: {}]
  %s5 = inlined_call_operand.vmem [shape: f32[4,128], index: 5, kind: input, shape index: {}]
  %s6 = inlined_call_operand.hbm [shape: f32[2,512], index: 6, kind: output, shape index: {}]
  %s7 = sld [smem:[#allocation0]]
  $region57: #{tpu_custom_call.1} parent=0
    _
  %s9 = ssub.s32 1, %s7
  %s10 = scalar_select 0, %s9, %s7
  $region1: #{tpu_custom_call.1} parent=0
    #allocation2 [shape = 'u8[2048]{0}', space=vmem, size = 0x800, scoped, tag = 'output window, operand 0']
    #allocation3 [shape = 's32[2]{0}', space=sflag, size = 0x8, scoped, tag = 'scoped memory for tpu_custom_call.1']
    %11 = vsyncpa [#allocation3], 0
    %s12 = scalar_lea.sflag [#allocation3], 1
    %13 = vsyncpa %s12, 0
    loop: start=0, step=1, limit=6
    $region2: #{tpu_custom_call.1} parent=1 // loop_pre_header
      _
    $region3: #{tpu_custom_call.1} parent=1 // loop_header
      %s15 = sphi 0, %s19
      %p16 = scmp.ge.s32.totalorder %s15, 6
      %s22 = sphi 0, %s34
      %s23 = sphi 0, %s30
      %s24 = sphi 0, %s22
      %s25 = sphi 0, %s23
      %s26 = sphi 0, %s24
      %s27 = sphi 0, %s25
      %s39 = sphi 0, %s41
      %s42 = sphi 0, %s39
      %s43 = sphi 0, %s42
      %s59 = sphi 0, %s43
      %s67 = sphi 0, %s69
      %s70 = sphi 0, %s67
      %s71 = sphi 0, %s70
      %s87 = sphi 0, %s71
      %s95 = sphi 0, %s97
      %s98 = sphi 0, %s95
      %s99 = sphi 0, %s98
      %s115 = sphi 0, %s99
      %s123 = sphi 0, %s125
      %s126 = sphi 0, %s123
      %s127 = sphi 0, %s126
      %s143 = sphi 0, %s127
      %s147 = sphi 0, %s147
      %s149 = sphi 0, %s147
      %s150 = sphi 0, %s149
      %s164 = sphi 0, %s150
      %s168 = sphi 0, %s168
      %s170 = sphi 0, %s168
      %s171 = sphi 0, %s170
      %s185 = sphi 0, %s171
      %s193 = sphi 0, %s195
      %s196 = sphi 0, %s193
      %s197 = sphi 0, %s196
      %s213 = sphi 0, %s197
    $region4: #{tpu_custom_call.1} parent=1 // loop_header_branch
      %18 = sbr.rel (%p16) target = $region8
    $region5: #{tpu_custom_call.1} parent=1 // loop_body
      %s20 = ssub.s32 %s15, 1
      %s21 = ssub.s32 %s15, 2
      %s28 = sadd.s32 1, %s23
      %p29 = scmp.ge.s32.totalorder %s28, 1
      %s30 = scalar_select %p29, 0, %s28
      %s31 = sadd.s32 1, %s22
      %s32 = scalar_select %p29, %s31, %s22
      %p33 = scmp.ge.s32.totalorder %s32, 4
      %s34 = scalar_select %p33, 0, %s32
      %s35 = ssub.s32 %s22, %s34
      %s36 = ssub.s32 %s23, %s30
      %s37 = sor.u32 %s35, %s36
      %p38 = scmp.eq.s32.totalorder %s37, 0
      %s40 = sadd.s32 %s39, 1
      %s41 = scalar_select %p38, %s39, %s40
      %p44 = pneg %p38
      %p45 = scmp.eq.s32.totalorder %s15, 3
      %p46 = por %p44, %p45
      %p47 = scmp.ne.s32.totalorder %s39, %s42
      %p48 = scmp.eq.s32.totalorder %s15, 0
      %p49 = por %p47, %p48
      %p50 = scmp.ne.s32.totalorder %s39, %s42
      %p51 = scmp.eq.s32.totalorder %s20, 3
      %p52 = por %p50, %p51
      %p53 = scmp.ne.s32.totalorder %s42, %s43
      %p54 = scmp.eq.s32.totalorder %s20, 0
      %p55 = por %p53, %p54
      %p56 = scmp.ne.s32.totalorder %s42, %s43
      %p57 = scmp.eq.s32.totalorder %s21, 3
      %p58 = por %p56, %p57
      %p60 = scmp.ne.s32.totalorder %s43, %s59
      %p61 = scmp.eq.s32.totalorder %s21, 0
      %p62 = por %p60, %p61
      %s63 = ssub.s32 %s22, %s34
      %s64 = ssub.s32 %s23, %s30
      %s65 = sor.u32 %s63, %s64
      %p66 = scmp.eq.s32.totalorder %s65, 0
      %s68 = sadd.s32 %s67, 1
      %s69 = scalar_select %p66, %s67, %s68
      %p72 = pneg %p66
      %p73 = scmp.eq.s32.totalorder %s15, 3
      %p74 = por %p72, %p73
      %p75 = scmp.ne.s32.totalorder %s67, %s70
      %p76 = scmp.eq.s32.totalorder %s15, 0
      %p77 = por %p75, %p76
      %p78 = scmp.ne.s32.totalorder %s67, %s70
      %p79 = scmp.eq.s32.totalorder %s20, 3
      %p80 = por %p78, %p79
      %p81 = scmp.ne.s32.totalorder %s70, %s71
      %p82 = scmp.eq.s32.totalorder %s20, 0
      %p83 = por %p81, %p82
      %p84 = scmp.ne.s32.totalorder %s70, %s71
      %p85 = scmp.eq.s32.totalorder %s21, 3
      %p86 = por %p84, %p85
      %p88 = scmp.ne.s32.totalorder %s71, %s87
      %p89 = scmp.eq.s32.totalorder %s21, 0
      %p90 = por %p88, %p89
      %s91 = ssub.s32 %s22, %s34
      %s92 = ssub.s32 %s23, %s30
      %s93 = sor.u32 %s91, %s92
      %p94 = scmp.eq.s32.totalorder %s93, 0
      %s96 = sadd.s32 %s95, 1
      %s97 = scalar_select %p94, %s95, %s96
      %p100 = pneg %p94
      %p101 = scmp.eq.s32.totalorder %s15, 3
      %p102 = por %p100, %p101
      %p103 = scmp.ne.s32.totalorder %s95, %s98
      %p104 = scmp.eq.s32.totalorder %s15, 0
      %p105 = por %p103, %p104
      %p106 = scmp.ne.s32.totalorder %s95, %s98
      %p107 = scmp.eq.s32.totalorder %s20, 3
      %p108 = por %p106, %p107
      %p109 = scmp.ne.s32.totalorder %s98, %s99
      %p110 = scmp.eq.s32.totalorder %s20, 0
      %p111 = por %p109, %p110
      %p112 = scmp.ne.s32.totalorder %s98, %s99
      %p113 = scmp.eq.s32.totalorder %s21, 3
      %p114 = por %p112, %p113
      %p116 = scmp.ne.s32.totalorder %s99, %s115
      %p117 = scmp.eq.s32.totalorder %s21, 0
      %p118 = por %p116, %p117
      %s119 = ssub.s32 %s22, %s34
      %s120 = ssub.s32 %s23, %s30
      %s121 = sor.u32 %s119, %s120
      %p122 = scmp.eq.s32.totalorder %s121, 0
      %s124 = sadd.s32 %s123, 1
      %s125 = scalar_select %p122, %s123, %s124
      %p128 = pneg %p122
      %p129 = scmp.eq.s32.totalorder %s15, 3
      %p130 = por %p128, %p129
      %p131 = scmp.ne.s32.totalorder %s123, %s126
      %p132 = scmp.eq.s32.totalorder %s15, 0
      %p133 = por %p131, %p132
      %p134 = scmp.ne.s32.totalorder %s123, %s126
      %p135 = scmp.eq.s32.totalorder %s20, 3
      %p136 = por %p134, %p135
      %p137 = scmp.ne.s32.totalorder %s126, %s127
      %p138 = scmp.eq.s32.totalorder %s20, 0
      %p139 = por %p137, %p138
      %p140 = scmp.ne.s32.totalorder %s126, %s127
      %p141 = scmp.eq.s32.totalorder %s21, 3
      %p142 = por %p140, %p141
      %p144 = scmp.ne.s32.totalorder %s127, %s143
      %p145 = scmp.eq.s32.totalorder %s21, 0
      %p146 = por %p144, %p145
      %s148 = sadd.s32 %s147, 1
      %p151 = scmp.eq.s32.totalorder %s15, 3
      %p152 = scmp.ne.s32.totalorder %s147, %s149
      %p153 = scmp.eq.s32.totalorder %s15, 0
      %p154 = por %p152, %p153
      %p155 = scmp.ne.s32.totalorder %s147, %s149
      %p156 = scmp.eq.s32.totalorder %s20, 3
      %p157 = por %p155, %p156
      %p158 = scmp.ne.s32.totalorder %s149, %s150
      %p159 = scmp.eq.s32.totalorder %s20, 0
      %p160 = por %p158, %p159
      %p161 = scmp.ne.s32.totalorder %s149, %s150
      %p162 = scmp.eq.s32.totalorder %s21, 3
      %p163 = por %p161, %p162
      %p165 = scmp.ne.s32.totalorder %s150, %s164
      %p166 = scmp.eq.s32.totalorder %s21, 0
      %p167 = por %p165, %p166
      %s169 = sadd.s32 %s168, 1
      %p172 = scmp.eq.s32.totalorder %s15, 3
      %p173 = scmp.ne.s32.totalorder %s168, %s170
      %p174 = scmp.eq.s32.totalorder %s15, 0
      %p175 = por %p173, %p174
      %p176 = scmp.ne.s32.totalorder %s168, %s170
      %p177 = scmp.eq.s32.totalorder %s20, 3
      %p178 = por %p176, %p177
      %p179 = scmp.ne.s32.totalorder %s170, %s171
      %p180 = scmp.eq.s32.totalorder %s20, 0
      %p181 = por %p179, %p180
      %p182 = scmp.ne.s32.totalorder %s170, %s171
      %p183 = scmp.eq.s32.totalorder %s21, 3
      %p184 = por %p182, %p183
      %p186 = scmp.ne.s32.totalorder %s171, %s185
      %p187 = scmp.eq.s32.totalorder %s21, 0
      %p188 = por %p186, %p187
      %s189 = ssub.s32 %s23, %s30
      %s190 = ssub.s32 %s22, %s34
      %s191 = sor.u32 %s189, %s190
      %p192 = scmp.eq.s32.totalorder %s191, 0
      %s194 = sadd.s32 %s193, 1
      %s195 = scalar_select %p192, %s193, %s194
      %p198 = pneg %p192
      %p199 = scmp.eq.s32.totalorder %s15, 3
      %p200 = por %p198, %p199
      %p201 = scmp.ne.s32.totalorder %s193, %s196
      %p202 = scmp.eq.s32.totalorder %s15, 0
      %p203 = por %p201, %p202
      %p204 = scmp.ne.s32.totalorder %s193, %s196
      %p205 = scmp.eq.s32.totalorder %s20, 3
      %p206 = por %p204, %p205
      %p207 = scmp.ne.s32.totalorder %s196, %s197
      %p208 = scmp.eq.s32.totalorder %s20, 0
      %p209 = por %p207, %p208
      %p210 = scmp.ne.s32.totalorder %s196, %s197
      %p211 = scmp.eq.s32.totalorder %s21, 3
      %p212 = por %p210, %p211
      %p214 = scmp.ne.s32.totalorder %s197, %s213
      %p215 = scmp.eq.s32.totalorder %s21, 0
      %p216 = por %p214, %p215
      %p217 = scmp.le.s32.totalorder 1, %s15
      %p218 = scmp.lt.s32.totalorder %s15, 5
      %p219 = pnand %p217, %p218
      %p220 = pneg %p219
      // Predicated region
      $region9: #{tpu_custom_call.1} parent=5 // pred_check
        _
      $region10: #{tpu_custom_call.1} parent=5 // pred_check_branch
        %222 = sbr.rel (%p219) target = $region12
      $region11: #{tpu_custom_call.1} parent=5 // pred_region
        %s223 = ssub.s32 %s15, 1
        // Predicated region
        $region13: #{tpu_custom_call.1} parent=11 // pred_check
          %p224 = pneg %p160
        $region14: #{tpu_custom_call.1} parent=11 // pred_check_branch
          %226 = sbr.rel (%p224) target = $region16
        $region15: #{tpu_custom_call.1} parent=11 // pred_region
          _
        $region16: #{tpu_custom_call.1} parent=11 // pred_fallthru
          _
        // Predicated region
        $region17: #{tpu_custom_call.1} parent=11 // pred_check
          %p227 = pneg %p181
        $region18: #{tpu_custom_call.1} parent=11 // pred_check_branch
          %229 = sbr.rel (%p227) target = $region20
        $region19: #{tpu_custom_call.1} parent=11 // pred_region
          _
        $region20: #{tpu_custom_call.1} parent=11 // pred_fallthru
          _
      $region12: #{tpu_custom_call.1} parent=5 // pred_fallthru
        _
      %p230 = scmp.lt.s32.totalorder %s15, 4
      // Predicated region
      $region21: #{tpu_custom_call.1} parent=5 // pred_check
        %p231 = pneg %p230
      $region22: #{tpu_custom_call.1} parent=5 // pred_check_branch
        %233 = sbr.rel (%p231) target = $region24
      $region23: #{tpu_custom_call.1} parent=5 // pred_region
        // Predicated region
        $region25: #{tpu_custom_call.1} parent=23 // pred_check
          %p234 = pneg %p49
        $region26: #{tpu_custom_call.1} parent=23 // pred_check_branch
          %236 = sbr.rel (%p234) target = $region28
        $region27: #{tpu_custom_call.1} parent=23 // pred_region
          %s237 = smul.u32 4, %s23
          %p238 = scmp.lt.s32.totalorder %s22, 3
          %s239 = scalar_select %p238, %s22, 3
          %p240 = scmp.lt.s32.totalorder %s237, 3
          %s241 = scalar_select %p240, %s237, 3
          %s242 = smul.addr %s239, 4
          %s243 = sadd.s32 %s241, %s242
          %s244 = smul.addr %s243, 8
          %s245 = scalar_lea.vmem %s0, %s244
          %s246 = smul.u32 4, %s23
        $region28: #{tpu_custom_call.1} parent=23 // pred_fallthru
          _
        // Predicated region
        $region29: #{tpu_custom_call.1} parent=23 // pred_check
          %p247 = pneg %p77
        $region30: #{tpu_custom_call.1} parent=23 // pred_check_branch
          %249 = sbr.rel (%p247) target = $region32
        $region31: #{tpu_custom_call.1} parent=23 // pred_region
          %s250 = smul.u32 4, %s23
          %p251 = scmp.lt.s32.totalorder %s22, 3
          %s252 = scalar_select %p251, %s22, 3
          %p253 = scmp.lt.s32.totalorder %s250, 3
          %s254 = scalar_select %p253, %s250, 3
          %s255 = smul.addr %s252, 4
          %s256 = sadd.s32 %s254, %s255
          %s257 = smul.addr %s256, 8
          %s258 = scalar_lea.vmem %s1, %s257
          %s259 = smul.u32 4, %s23
        $region32: #{tpu_custom_call.1} parent=23 // pred_fallthru
          _
        // Predicated region
        $region33: #{tpu_custom_call.1} parent=23 // pred_check
          %p260 = pneg %p105
        $region34: #{tpu_custom_call.1} parent=23 // pred_check_branch
          %262 = sbr.rel (%p260) target = $region36
        $region35: #{tpu_custom_call.1} parent=23 // pred_region
          %p263 = scmp.lt.s32.totalorder %s22, 3
          %s264 = scalar_select %p263, %s22, 3
          %p265 = scmp.lt.s32.totalorder %s23, 0
          %s266 = scalar_select %p265, %s23, 0
          %s267 = sadd.s32 %s266, %s264
          %s268 = smul.addr %s267, 2
          %s269 = scalar_lea.vmem %s2, %s268
        $region36: #{tpu_custom_call.1} parent=23 // pred_fallthru
          _
        // Predicated region
        $region37: #{tpu_custom_call.1} parent=23 // pred_check
          %p270 = pneg %p133
        $region38: #{tpu_custom_call.1} parent=23 // pred_check_branch
          %272 = sbr.rel (%p270) target = $region40
        $region39: #{tpu_custom_call.1} parent=23 // pred_region
          %s273 = smul.u32 4, %s23
          %p274 = scmp.lt.s32.totalorder %s22, 3
          %s275 = scalar_select %p274, %s22, 3
          %p276 = scmp.lt.s32.totalorder %s273, 3
          %s277 = scalar_select %p276, %s273, 3
          %s278 = smul.addr %s275, 4
          %s279 = sadd.s32 %s277, %s278
          %s280 = smul.addr %s279, 8
          %s281 = scalar_lea.vmem %s3, %s280
          %s282 = smul.u32 4, %s23
        $region40: #{tpu_custom_call.1} parent=23 // pred_fallthru
          _
      $region24: #{tpu_custom_call.1} parent=5 // pred_fallthru
        _
      %p283 = scmp.le.s32.totalorder 1, %s15
      %p284 = scmp.lt.s32.totalorder %s15, 5
      %p285 = pnand %p283, %p284
      %p286 = pneg %p285
      // Predicated region
      $region41: #{tpu_custom_call.1} parent=5 // pred_check
        _
      $region42: #{tpu_custom_call.1} parent=5 // pred_check_branch
        %288 = sbr.rel (%p285) target = $region44
      $region43: #{tpu_custom_call.1} parent=5 // pred_region
        %s289 = ssub.s32 %s15, 1
        %s290 = smul.u32 4, %s25
        %p291 = scmp.lt.s32.totalorder %s24, 3
        %s292 = scalar_select %p291, %s24, 3
        %p293 = scmp.lt.s32.totalorder %s290, 3
        %s294 = scalar_select %p293, %s290, 3
        %s295 = smul.addr %s292, 4
        %s296 = sadd.s32 %s294, %s295
        %s297 = smul.addr %s296, 8
        %s298 = scalar_lea.vmem %s0, %s297
        %p299 = pneg %p55
        %p300 = pneg %p52
        %s301 = smul.u32 4, %s25
        %p302 = scmp.lt.s32.totalorder %s24, 3
        %s303 = scalar_select %p302, %s24, 3
        %p304 = scmp.lt.s32.totalorder %s301, 3
        %s305 = scalar_select %p304, %s301, 3
        %s306 = smul.addr %s303, 4
        %s307 = sadd.s32 %s305, %s306
        %s308 = smul.addr %s307, 8
        %s309 = scalar_lea.vmem %s1, %s308
        %p310 = pneg %p83
        %p311 = pneg %p80
        %p312 = scmp.lt.s32.totalorder %s24, 3
        %s313 = scalar_select %p312, %s24, 3
        %p314 = scmp.lt.s32.totalorder %s25, 0
        %s315 = scalar_select %p314, %s25, 0
        %s316 = sadd.s32 %s315, %s313
        %s317 = smul.addr %s316, 2
        %s318 = scalar_lea.vmem %s2, %s317
        %p319 = pneg %p111
        %p320 = pneg %p108
        %s321 = smul.u32 4, %s25
        %p322 = scmp.lt.s32.totalorder %s24, 3
        %s323 = scalar_select %p322, %s24, 3
        %p324 = scmp.lt.s32.totalorder %s321, 3
        %s325 = scalar_select %p324, %s321, 3
        %s326 = smul.addr %s323, 4
        %s327 = sadd.s32 %s325, %s326
        %s328 = smul.addr %s327, 8
        %s329 = scalar_lea.vmem %s3, %s328
        %p330 = pneg %p139
        %p331 = pneg %p136
        %p332 = pneg %p160
        %p333 = pneg %p157
        %p334 = pneg %p181
        %p335 = pneg %p178
        %p336 = pneg %p209
        %p337 = pneg %p206
        %s338 = sand.u32 %s196, 1
        %s339 = scalar_lea.sflag [#allocation3], %s338
        %s340 = sand.u32 %s196, 1
        %s341 = smul.addr %s340, 2
        %s342 = scalar_lea.vmem [#allocation2], %s341
        %s343 = smul.u32 4, %s25
        %p344 = scmp.lt.s32.totalorder %s24, 3
        %s345 = scalar_select %p344, %s24, 3
        %p346 = scmp.lt.s32.totalorder %s343, 3
        %s347 = scalar_select %p346, %s343, 3
        %s348 = smul.addr %s345, 4
        %s349 = sadd.s32 %s347, %s348
        %s350 = smul.addr %s349, 8
        %s351 = scalar_lea.vmem %s0, %s350
        %s352 = smul.u32 4, %s25
        %s353 = smul.u32 4, %s25
        %p354 = scmp.lt.s32.totalorder %s24, 3
        %s355 = scalar_select %p354, %s24, 3
        %p356 = scmp.lt.s32.totalorder %s353, 3
        %s357 = scalar_select %p356, %s353, 3
        %s358 = smul.addr %s355, 4
        %s359 = sadd.s32 %s357, %s358
        %s360 = smul.addr %s359, 8
        %s361 = scalar_lea.vmem %s1, %s360
        %s362 = smul.u32 4, %s25
        %p363 = scmp.lt.s32.totalorder %s24, 3
        %s364 = scalar_select %p363, %s24, 3
        %p365 = scmp.lt.s32.totalorder %s25, 0
        %s366 = scalar_select %p365, %s25, 0
        %s367 = sadd.s32 %s366, %s364
        %s368 = smul.addr %s367, 2
        %s369 = scalar_lea.vmem %s2, %s368
        %s370 = smul.u32 4, %s25
        %p371 = scmp.lt.s32.totalorder %s24, 3
        %s372 = scalar_select %p371, %s24, 3
        %p373 = scmp.lt.s32.totalorder %s370, 3
        %s374 = scalar_select %p373, %s370, 3
        %s375 = smul.addr %s372, 4
        %s376 = sadd.s32 %s374, %s375
        %s377 = smul.addr %s376, 8
        %s378 = scalar_lea.vmem %s3, %s377
        %s379 = smul.u32 4, %s25
        %v380 = vld [vmem:[%s351] sm:$0xff]
        %v381 = vld [vmem:[%s351 + $0x8] sm:$0xff]
        %v382 = vld [vmem:[%s351 + $0x10] sm:$0xff]
        %v383 = vld [vmem:[%s351 + $0x18] sm:$0xff]
        %v384 = vld [vmem:[%s361] sm:$0xff]
        %v385 = vld [vmem:[%s361 + $0x8] sm:$0xff]
        %v386 = vld [vmem:[%s361 + $0x10] sm:$0xff]
        %v387 = vld [vmem:[%s361 + $0x18] sm:$0xff]
        %v388 = vld [vmem:[%s369] sm:$0x3]
        %v389 = vld [vmem:[%s378] sm:$0xff]
        %v390 = vld [vmem:[%s378 + $0x8] sm:$0xff]
        %v391 = vld [vmem:[%s378 + $0x10] sm:$0xff]
        %v392 = vld [vmem:[%s378 + $0x18] sm:$0xff]
        %v393 = vld [vmem:[%s4] sm:$0xf]
        %v394 = vld [vmem:[%s5] sm:$0xf]
        %396 = vset.pattern.permute.xlu0 0
        %397 = vperm.xlu0 %396, %v389
        %v398 = vpop.permute.xlu0 %397
        %401 = vset.pattern.permute.xlu0 0
        %402 = vperm.xlu0 %401, %v390
        %v403 = vpop.permute.xlu0 %402
        %406 = vset.pattern.permute.xlu0 0
        %407 = vperm.xlu0 %406, %v391
        %v408 = vpop.permute.xlu0 %407
        %411 = vset.pattern.permute.xlu0 0
        %412 = vperm.xlu0 %411, %v392
        %v413 = vpop.permute.xlu0 %412
        %vm415 = vcmask 31744
        %v417 = vsel %vm415, %v380, 0
        %v420 = vsel %vm415, %v381, 0
        %v423 = vsel %vm415, %v382, 0
        %v426 = vsel %vm415, %v383, 0
        %vm428 = vcmask 1043456
        %v430 = vsel %vm428, %v394, 0
        %432 = vmatprep.subr.mxu0 0.0
        %v433 = vand.u32 %v430, 4294901760
        %434 = vmatpush1.msra.mxu0 %v433
        %435 = vmatprep.subr.mxu0 0.0
        %436 = vmatpush1.msra.mxu0 0.0
        %437 = vmatprep.subr.mxu0 0.0
        %438 = vmatpush1.msra.mxu0 0.0
        %439 = vmatprep.subr.mxu0 0.0
        %440 = vmatpush1.msra.mxu0 0.0
        %441 = vmatprep.subr.mxu0 0.0
        %442 = vmatpush1.msra.mxu0 0.0
        %443 = vmatprep.subr.mxu0 0.0
        %444 = vmatpush1.msra.mxu0 0.0
        %445 = vmatprep.subr.mxu0 0.0
        %446 = vmatpush1.msra.mxu0 0.0
        %447 = vmatprep.subr.mxu0 0.0
        %448 = vmatpush1.msra.mxu0 0.0
        %449 = vmatprep.subr.mxu0 0.0
        %450 = vmatpush1.msra.mxu0 0.0
        %451 = vmatprep.subr.mxu0 0.0
        %452 = vmatpush1.msra.mxu0 0.0
        %453 = vmatprep.subr.mxu0 0.0
        %454 = vmatpush1.msra.mxu0 0.0
        %455 = vmatprep.subr.mxu0 0.0
        %456 = vmatpush1.msra.mxu0 0.0
        %457 = vmatprep.subr.mxu0 0.0
        %458 = vmatpush1.msra.mxu0 0.0
        %459 = vmatprep.subr.mxu0 0.0
        %460 = vmatpush1.msra.mxu0 0.0
        %461 = vmatprep.subr.mxu0 0.0
        %462 = vmatpush1.msra.mxu0 0.0
        %463 = vmatprep.subr.mxu0 0.0
        %464 = vmatpush1.msra.mxu0 0.0
        %465 = vmatprep.subr.mxu0 0.0
        %466 = vmatpush1.msra.mxu0 0.0
        %467 = vmatprep.subr.mxu0 0.0
        %468 = vmatpush1.msra.mxu0 0.0
        %469 = vmatprep.subr.mxu0 0.0
        %470 = vmatpush1.msra.mxu0 0.0
        %471 = vmatprep.subr.mxu0 0.0
        %472 = vmatpush1.msra.mxu0 0.0
        %473 = vmatprep.subr.mxu0 0.0
        %474 = vmatpush1.msra.mxu0 0.0
        %475 = vmatprep.subr.mxu0 0.0
        %476 = vmatpush1.msra.mxu0 0.0
        %477 = vmatprep.subr.mxu0 0.0
        %478 = vmatpush1.msra.mxu0 0.0
        %479 = vmatprep.subr.mxu0 0.0
        %480 = vmatpush1.msra.mxu0 0.0
        %481 = vmatprep.subr.mxu0 0.0
        %482 = vmatpush1.msra.mxu0 0.0
        %483 = vmatprep.subr.mxu0 0.0
        %484 = vmatpush1.msra.mxu0 0.0
        %485 = vmatprep.subr.mxu0 0.0
        %486 = vmatpush1.msra.mxu0 0.0
        %487 = vmatprep.subr.mxu0 0.0
        %488 = vmatpush1.msra.mxu0 0.0
        %489 = vmatprep.subr.mxu0 0.0
        %490 = vmatpush1.msra.mxu0 0.0
        %491 = vmatprep.subr.mxu0 0.0
        %492 = vmatpush1.msra.mxu0 0.0
        %493 = vmatprep.subr.mxu0 0.0
        %494 = vmatpush1.msra.mxu0 0.0
        %495 = vmatprep.subr.mxu0 0.0
        %496 = vmatpush1.msra.mxu0 0.0
        %497 = vmatprep.mubr.f32.mxu0 0.0
        %v498 = vand.u32 %v417, 4294901760
        %v499 = vsub.f32 %v417, %v498
        %v500 = vand.u32 %v499, 4294901760
        %v501 = vsub.f32 %v499, %v500
        %v502 = vand.u32 %v501, 4294901760
        %503 = vmatmul.mubr.f32.gmra.mrb[0].mxu0 %v502
        %v504 = vpop.f32.mrb[0].mxu0
        %v505 = vadd.f32 %v398, %v504
        %v506 = vpop.f32.mrb[0].mxu0
        %507 = vmatprep.mubr.f32.mxu0 0.0
        %v508 = vand.u32 %v420, 4294901760
        %v509 = vsub.f32 %v420, %v508
        %v510 = vand.u32 %v509, 4294901760
        %v511 = vsub.f32 %v509, %v510
        %v512 = vand.u32 %v511, 4294901760
        %513 = vmatmul.mubr.f32.gmra.mrb[0].mxu0 %v512
        %v514 = vpop.f32.mrb[0].mxu0
        %v515 = vadd.f32 %v403, %v514
        %v516 = vpop.f32.mrb[0].mxu0
        %517 = vmatprep.mubr.f32.mxu0 0.0
        %v518 = vand.u32 %v423, 4294901760
        %v519 = vsub.f32 %v423, %v518
        %v520 = vand.u32 %v519, 4294901760
        %v521 = vsub.f32 %v519, %v520
        %v522 = vand.u32 %v521, 4294901760
        %523 = vmatmul.mubr.f32.gmra.mrb[0].mxu0 %v522
        %v524 = vpop.f32.mrb[0].mxu0
        %v525 = vadd.f32 %v408, %v524
        %v526 = vpop.f32.mrb[0].mxu0
        %527 = vmatprep.mubr.f32.mxu0 0.0
        %v528 = vand.u32 %v426, 4294901760
        %v529 = vsub.f32 %v426, %v528
        %v530 = vand.u32 %v529, 4294901760
        %v531 = vsub.f32 %v529, %v530
        %v532 = vand.u32 %v531, 4294901760
        %533 = vmatmul.mubr.f32.gmra.mrb[0].mxu0 %v532
        %v534 = vpop.f32.mrb[0].mxu0
        %v535 = vadd.f32 %v413, %v534
        %v536 = vpop.f32.mrb[0].mxu0
        %537 = vdwg.mxu0
        %538 = vmatprep.subr.mxu0 0.0
        %v539 = vand.u32 %v430, 4294901760
        %v540 = vsub.f32 %v430, %v539
        %v541 = vand.u32 %v540, 4294901760
        %v542 = vsub.f32 %v540, %v541
        %v543 = vand.u32 %v542, 4294901760
        %544 = vmatpush1.msra.mxu0 %v543
        %545 = vmatprep.subr.mxu0 0.0
        %546 = vmatpush1.msra.mxu0 0.0
        %547 = vmatprep.subr.mxu0 0.0
        %548 = vmatpush1.msra.mxu0 0.0
        %549 = vmatprep.subr.mxu0 0.0
        %550 = vmatpush1.msra.mxu0 0.0
        %551 = vmatprep.subr.mxu0 0.0
        %552 = vmatpush1.msra.mxu0 0.0
        %553 = vmatprep.subr.mxu0 0.0
        %554 = vmatpush1.msra.mxu0 0.0
        %555 = vmatprep.subr.mxu0 0.0
        %556 = vmatpush1.msra.mxu0 0.0
        %557 = vmatprep.subr.mxu0 0.0
        %558 = vmatpush1.msra.mxu0 0.0
        %559 = vmatprep.subr.mxu0 0.0
        %560 = vmatpush1.msra.mxu0 0.0
        %561 = vmatprep.subr.mxu0 0.0
        %562 = vmatpush1.msra.mxu0 0.0
        %563 = vmatprep.subr.mxu0 0.0
        %564 = vmatpush1.msra.mxu0 0.0
        %565 = vmatprep.subr.mxu0 0.0
        %566 = vmatpush1.msra.mxu0 0.0
        %567 = vmatprep.subr.mxu0 0.0
        %568 = vmatpush1.msra.mxu0 0.0
        %569 = vmatprep.subr.mxu0 0.0
        %570 = vmatpush1.msra.mxu0 0.0
        %571 = vmatprep.subr.mxu0 0.0
        %572 = vmatpush1.msra.mxu0 0.0
        %573 = vmatprep.subr.mxu0 0.0
        %574 = vmatpush1.msra.mxu0 0.0
        %575 = vmatprep.subr.mxu0 0.0
        %576 = vmatpush1.msra.mxu0 0.0
        %577 = vmatprep.subr.mxu0 0.0
        %578 = vmatpush1.msra.mxu0 0.0
        %579 = vmatprep.subr.mxu0 0.0
        %580 = vmatpush1.msra.mxu0 0.0
        %581 = vmatprep.subr.mxu0 0.0
        %582 = vmatpush1.msra.mxu0 0.0
        %583 = vmatprep.subr.mxu0 0.0
        %584 = vmatpush1.msra.mxu0 0.0
        %585 = vmatprep.subr.mxu0 0.0
        %586 = vmatpush1.msra.mxu0 0.0
        %587 = vmatprep.subr.mxu0 0.0
        %588 = vmatpush1.msra.mxu0 0.0
        %589 = vmatprep.subr.mxu0 0.0
        %590 = vmatpush1.msra.mxu0 0.0
        %591 = vmatprep.subr.mxu0 0.0
        %592 = vmatpush1.msra.mxu0 0.0
        %593 = vmatprep.subr.mxu0 0.0
        %594 = vmatpush1.msra.mxu0 0.0
        %595 = vmatprep.subr.mxu0 0.0
        %596 = vmatpush1.msra.mxu0 0.0
        %597 = vmatprep.subr.mxu0 0.0
        %598 = vmatpush1.msra.mxu0 0.0
        %599 = vmatprep.subr.mxu0 0.0
        %600 = vmatpush1.msra.mxu0 0.0
        %601 = vmatprep.subr.mxu0 0.0
        %602 = vmatpush1.msra.mxu0 0.0
        %603 = vmatprep.subr.mxu0 0.0
        %604 = vmatpush1.msra.mxu0 0.0
        %605 = vmatprep.subr.mxu0 0.0
        %606 = vmatpush1.msra.mxu0 0.0
        %607 = vmatprep.mubr.f32.mxu0 0.0
        %v608 = vand.u32 %v417, 4294901760
        %609 = vmatmul.mubr.f32.gmra.mrb[0].mxu0 %v608
        %v610 = vpop.f32.mrb[0].mxu0
        %v611 = vadd.f32 %v505, %v610
        %v612 = vpop.f32.mrb[0].mxu0
        %613 = vmatprep.mubr.f32.mxu0 0.0
        %v614 = vand.u32 %v420, 4294901760
        %615 = vmatmul.mubr.f32.gmra.mrb[0].mxu0 %v614
        %v616 = vpop.f32.mrb[0].mxu0
        %v617 = vadd.f32 %v515, %v616
        %v618 = vpop.f32.mrb[0].mxu0
        %619 = vmatprep.mubr.f32.mxu0 0.0
        %v620 = vand.u32 %v423, 4294901760
        %621 = vmatmul.mubr.f32.gmra.mrb[0].mxu0 %v620
        %v622 = vpop.f32.mrb[0].mxu0
        %v623 = vadd.f32 %v525, %v622
        %v624 = vpop.f32.mrb[0].mxu0
        %625 = vmatprep.mubr.f32.mxu0 0.0
        %v626 = vand.u32 %v426, 4294901760
        %627 = vmatmul.mubr.f32.gmra.mrb[0].mxu0 %v626
        %v628 = vpop.f32.mrb[0].mxu0
        %v629 = vadd.f32 %v535, %v628
        %v630 = vpop.f32.mrb[0].mxu0
        %631 = vdwg.mxu0
        %632 = vmatprep.subr.mxu0 0.0
        %v633 = vand.u32 %v430, 4294901760
        %v634 = vsub.f32 %v430, %v633
        %635 = vmatpush1.msra.mxu0 %v634
        %636 = vmatprep.subr.mxu0 0.0
        %637 = vmatpush1.msra.mxu0 0.0
        %638 = vmatprep.subr.mxu0 0.0
        %639 = vmatpush1.msra.mxu0 0.0
        %640 = vmatprep.subr.mxu0 0.0
        %641 = vmatpush1.msra.mxu0 0.0
        %642 = vmatprep.subr.mxu0 0.0
        %643 = vmatpush1.msra.mxu0 0.0
        %644 = vmatprep.subr.mxu0 0.0
        %645 = vmatpush1.msra.mxu0 0.0
        %646 = vmatprep.subr.mxu0 0.0
        %647 = vmatpush1.msra.mxu0 0.0
        %648 = vmatprep.subr.mxu0 0.0
        %649 = vmatpush1.msra.mxu0 0.0
        %650 = vmatprep.subr.mxu0 0.0
        %651 = vmatpush1.msra.mxu0 0.0
        %652 = vmatprep.subr.mxu0 0.0
        %653 = vmatpush1.msra.mxu0 0.0
        %654 = vmatprep.subr.mxu0 0.0
        %655 = vmatpush1.msra.mxu0 0.0
        %656 = vmatprep.subr.mxu0 0.0
        %657 = vmatpush1.msra.mxu0 0.0
        %658 = vmatprep.subr.mxu0 0.0
        %659 = vmatpush1.msra.mxu0 0.0
        %660 = vmatprep.subr.mxu0 0.0
        %661 = vmatpush1.msra.mxu0 0.0
        %662 = vmatprep.subr.mxu0 0.0
        %663 = vmatpush1.msra.mxu0 0.0
        %664 = vmatprep.subr.mxu0 0.0
        %665 = vmatpush1.msra.mxu0 0.0
        %666 = vmatprep.subr.mxu0 0.0
        %667 = vmatpush1.msra.mxu0 0.0
        %668 = vmatprep.subr.mxu0 0.0
        %669 = vmatpush1.msra.mxu0 0.0
        %670 = vmatprep.subr.mxu0 0.0
        %671 = vmatpush1.msra.mxu0 0.0
        %672 = vmatprep.subr.mxu0 0.0
        %673 = vmatpush1.msra.mxu0 0.0
        %674 = vmatprep.subr.mxu0 0.0
        %675 = vmatpush1.msra.mxu0 0.0
        %676 = vmatprep.subr.mxu0 0.0
        %677 = vmatpush1.msra.mxu0 0.0
        %678 = vmatprep.subr.mxu0 0.0
        %679 = vmatpush1.msra.mxu0 0.0
        %680 = vmatprep.subr.mxu0 0.0
        %681 = vmatpush1.msra.mxu0 0.0
        %682 = vmatprep.subr.mxu0 0.0
        %683 = vmatpush1.msra.mxu0 0.0
        %684 = vmatprep.subr.mxu0 0.0
        %685 = vmatpush1.msra.mxu0 0.0
        %686 = vmatprep.subr.mxu0 0.0
        %687 = vmatpush1.msra.mxu0 0.0
        %688 = vmatprep.subr.mxu0 0.0
        %689 = vmatpush1.msra.mxu0 0.0
        %690 = vmatprep.subr.mxu0 0.0
        %691 = vmatpush1.msra.mxu0 0.0
        %692 = vmatprep.subr.mxu0 0.0
        %693 = vmatpush1.msra.mxu0 0.0
        %694 = vmatprep.subr.mxu0 0.0
        %695 = vmatpush1.msra.mxu0 0.0
        %696 = vmatprep.subr.mxu0 0.0
        %697 = vmatpush1.msra.mxu0 0.0
        %698 = vmatprep.mubr.f32.mxu0 0.0
        %v699 = vand.u32 %v417, 4294901760
        %v700 = vsub.f32 %v417, %v699
        %701 = vmatmul.mubr.f32.gmra.mrb[0].mxu0 %v700
        %v702 = vpop.f32.mrb[0].mxu0
        %v703 = vadd.f32 %v611, %v702
        %v704 = vpop.f32.mrb[0].mxu0
        %705 = vmatprep.mubr.f32.mxu0 0.0
        %v706 = vand.u32 %v420, 4294901760
        %v707 = vsub.f32 %v420, %v706
        %708 = vmatmul.mubr.f32.gmra.mrb[0].mxu0 %v707
        %v709 = vpop.f32.mrb[0].mxu0
        %v710 = vadd.f32 %v617, %v709
        %v711 = vpop.f32.mrb[0].mxu0
        %712 = vmatprep.mubr.f32.mxu0 0.0
        %v713 = vand.u32 %v423, 4294901760
        %v714 = vsub.f32 %v423, %v713
        %715 = vmatmul.mubr.f32.gmra.mrb[0].mxu0 %v714
        %v716 = vpop.f32.mrb[0].mxu0
        %v717 = vadd.f32 %v623, %v716
        %v718 = vpop.f32.mrb[0].mxu0
        %719 = vmatprep.mubr.f32.mxu0 0.0
        %v720 = vand.u32 %v426, 4294901760
        %v721 = vsub.f32 %v426, %v720
        %722 = vmatmul.mubr.f32.gmra.mrb[0].mxu0 %v721
        %v723 = vpop.f32.mrb[0].mxu0
        %v724 = vadd.f32 %v629, %v723
        %v725 = vpop.f32.mrb[0].mxu0
        %726 = vdwg.mxu0
        %727 = vmatprep.subr.mxu0 0.0
        %v728 = vand.u32 %v430, 4294901760
        %729 = vmatpush1.msra.mxu0 %v728
        %730 = vmatprep.subr.mxu0 0.0
        %731 = vmatpush1.msra.mxu0 0.0
        %732 = vmatprep.subr.mxu0 0.0
        %733 = vmatpush1.msra.mxu0 0.0
        %734 = vmatprep.subr.mxu0 0.0
        %735 = vmatpush1.msra.mxu0 0.0
        %736 = vmatprep.subr.mxu0 0.0
        %737 = vmatpush1.msra.mxu0 0.0
        %738 = vmatprep.subr.mxu0 0.0
        %739 = vmatpush1.msra.mxu0 0.0
        %740 = vmatprep.subr.mxu0 0.0
        %741 = vmatpush1.msra.mxu0 0.0
        %742 = vmatprep.subr.mxu0 0.0
        %743 = vmatpush1.msra.mxu0 0.0
        %744 = vmatprep.subr.mxu0 0.0
        %745 = vmatpush1.msra.mxu0 0.0
        %746 = vmatprep.subr.mxu0 0.0
        %747 = vmatpush1.msra.mxu0 0.0
        %748 = vmatprep.subr.mxu0 0.0
        %749 = vmatpush1.msra.mxu0 0.0
        %750 = vmatprep.subr.mxu0 0.0
        %751 = vmatpush1.msra.mxu0 0.0
        %752 = vmatprep.subr.mxu0 0.0
        %753 = vmatpush1.msra.mxu0 0.0
        %754 = vmatprep.subr.mxu0 0.0
        %755 = vmatpush1.msra.mxu0 0.0
        %756 = vmatprep.subr.mxu0 0.0
        %757 = vmatpush1.msra.mxu0 0.0
        %758 = vmatprep.subr.mxu0 0.0
        %759 = vmatpush1.msra.mxu0 0.0
        %760 = vmatprep.subr.mxu0 0.0
        %761 = vmatpush1.msra.mxu0 0.0
        %762 = vmatprep.subr.mxu0 0.0
        %763 = vmatpush1.msra.mxu0 0.0
        %764 = vmatprep.subr.mxu0 0.0
        %765 = vmatpush1.msra.mxu0 0.0
        %766 = vmatprep.subr.mxu0 0.0
        %767 = vmatpush1.msra.mxu0 0.0
        %768 = vmatprep.subr.mxu0 0.0
        %769 = vmatpush1.msra.mxu0 0.0
        %770 = vmatprep.subr.mxu0 0.0
        %771 = vmatpush1.msra.mxu0 0.0
        %772 = vmatprep.subr.mxu0 0.0
        %773 = vmatpush1.msra.mxu0 0.0
        %774 = vmatprep.subr.mxu0 0.0
        %775 = vmatpush1.msra.mxu0 0.0
        %776 = vmatprep.subr.mxu0 0.0
        %777 = vmatpush1.msra.mxu0 0.0
        %778 = vmatprep.subr.mxu0 0.0
        %779 = vmatpush1.msra.mxu0 0.0
        %780 = vmatprep.subr.mxu0 0.0
        %781 = vmatpush1.msra.mxu0 0.0
        %782 = vmatprep.subr.mxu0 0.0
        %783 = vmatpush1.msra.mxu0 0.0
        %784 = vmatprep.subr.mxu0 0.0
        %785 = vmatpush1.msra.mxu0 0.0
        %786 = vmatprep.subr.mxu0 0.0
        %787 = vmatpush1.msra.mxu0 0.0
        %788 = vmatprep.subr.mxu0 0.0
        %789 = vmatpush1.msra.mxu0 0.0
        %790 = vmatprep.subr.mxu0 0.0
        %791 = vmatpush1.msra.mxu0 0.0
        %792 = vmatprep.mubr.f32.mxu0 0.0
        %v793 = vand.u32 %v417, 4294901760
        %v794 = vsub.f32 %v417, %v793
        %v795 = vand.u32 %v794, 4294901760
        %796 = vmatmul.mubr.f32.gmra.mrb[0].mxu0 %v795
        %v797 = vpop.f32.mrb[0].mxu0
        %v798 = vadd.f32 %v703, %v797
        %v799 = vpop.f32.mrb[0].mxu0
        %800 = vmatprep.mubr.f32.mxu0 0.0
        %v801 = vand.u32 %v420, 4294901760
        %v802 = vsub.f32 %v420, %v801
        %v803 = vand.u32 %v802, 4294901760
        %804 = vmatmul.mubr.f32.gmra.mrb[0].mxu0 %v803
        %v805 = vpop.f32.mrb[0].mxu0
        %v806 = vadd.f32 %v710, %v805
        %v807 = vpop.f32.mrb[0].mxu0
        %808 = vmatprep.mubr.f32.mxu0 0.0
        %v809 = vand.u32 %v423, 4294901760
        %v810 = vsub.f32 %v423, %v809
        %v811 = vand.u32 %v810, 4294901760
        %812 = vmatmul.mubr.f32.gmra.mrb[0].mxu0 %v811
        %v813 = vpop.f32.mrb[0].mxu0
        %v814 = vadd.f32 %v717, %v813
        %v815 = vpop.f32.mrb[0].mxu0
        %816 = vmatprep.mubr.f32.mxu0 0.0
        %v817 = vand.u32 %v426, 4294901760
        %v818 = vsub.f32 %v426, %v817
        %v819 = vand.u32 %v818, 4294901760
        %820 = vmatmul.mubr.f32.gmra.mrb[0].mxu0 %v819
        %v821 = vpop.f32.mrb[0].mxu0
        %v822 = vadd.f32 %v724, %v821
        %v823 = vpop.f32.mrb[0].mxu0
        %824 = vdwg.mxu0
        %825 = vmatprep.subr.mxu0 0.0
        %v826 = vand.u32 %v430, 4294901760
        %v827 = vsub.f32 %v430, %v826
        %v828 = vand.u32 %v827, 4294901760
        %829 = vmatpush1.msra.mxu0 %v828
        %830 = vmatprep.subr.mxu0 0.0
        %831 = vmatpush1.msra.mxu0 0.0
        %832 = vmatprep.subr.mxu0 0.0
        %833 = vmatpush1.msra.mxu0 0.0
        %834 = vmatprep.subr.mxu0 0.0
        %835 = vmatpush1.msra.mxu0 0.0
        %836 = vmatprep.subr.mxu0 0.0
        %837 = vmatpush1.msra.mxu0 0.0
        %838 = vmatprep.subr.mxu0 0.0
        %839 = vmatpush1.msra.mxu0 0.0
        %840 = vmatprep.subr.mxu0 0.0
        %841 = vmatpush1.msra.mxu0 0.0
        %842 = vmatprep.subr.mxu0 0.0
        %843 = vmatpush1.msra.mxu0 0.0
        %844 = vmatprep.subr.mxu0 0.0
        %845 = vmatpush1.msra.mxu0 0.0
        %846 = vmatprep.subr.mxu0 0.0
        %847 = vmatpush1.msra.mxu0 0.0
        %848 = vmatprep.subr.mxu0 0.0
        %849 = vmatpush1.msra.mxu0 0.0
        %850 = vmatprep.subr.mxu0 0.0
        %851 = vmatpush1.msra.mxu0 0.0
        %852 = vmatprep.subr.mxu0 0.0
        %853 = vmatpush1.msra.mxu0 0.0
        %854 = vmatprep.subr.mxu0 0.0
        %855 = vmatpush1.msra.mxu0 0.0
        %856 = vmatprep.subr.mxu0 0.0
        %857 = vmatpush1.msra.mxu0 0.0
        %858 = vmatprep.subr.mxu0 0.0
        %859 = vmatpush1.msra.mxu0 0.0
        %860 = vmatprep.subr.mxu0 0.0
        %861 = vmatpush1.msra.mxu0 0.0
        %862 = vmatprep.subr.mxu0 0.0
        %863 = vmatpush1.msra.mxu0 0.0
        %864 = vmatprep.subr.mxu0 0.0
        %865 = vmatpush1.msra.mxu0 0.0
        %866 = vmatprep.subr.mxu0 0.0
        %867 = vmatpush1.msra.mxu0 0.0
        %868 = vmatprep.subr.mxu0 0.0
        %869 = vmatpush1.msra.mxu0 0.0
        %870 = vmatprep.subr.mxu0 0.0
        %871 = vmatpush1.msra.mxu0 0.0
        %872 = vmatprep.subr.mxu0 0.0
        %873 = vmatpush1.msra.mxu0 0.0
        %874 = vmatprep.subr.mxu0 0.0
        %875 = vmatpush1.msra.mxu0 0.0
        %876 = vmatprep.subr.mxu0 0.0
        %877 = vmatpush1.msra.mxu0 0.0
        %878 = vmatprep.subr.mxu0 0.0
        %879 = vmatpush1.msra.mxu0 0.0
        %880 = vmatprep.subr.mxu0 0.0
        %881 = vmatpush1.msra.mxu0 0.0
        %882 = vmatprep.subr.mxu0 0.0
        %883 = vmatpush1.msra.mxu0 0.0
        %884 = vmatprep.subr.mxu0 0.0
        %885 = vmatpush1.msra.mxu0 0.0
        %886 = vmatprep.subr.mxu0 0.0
        %887 = vmatpush1.msra.mxu0 0.0
        %888 = vmatprep.subr.mxu0 0.0
        %889 = vmatpush1.msra.mxu0 0.0
        %890 = vmatprep.subr.mxu0 0.0
        %891 = vmatpush1.msra.mxu0 0.0
        %892 = vmatprep.mubr.f32.mxu0 0.0
        %v893 = vand.u32 %v417, 4294901760
        %894 = vmatmul.mubr.f32.gmra.mrb[0].mxu0 %v893
        %v895 = vpop.f32.mrb[0].mxu0
        %v896 = vadd.f32 %v798, %v895
        %v897 = vpop.f32.mrb[0].mxu0
        %898 = vmatprep.mubr.f32.mxu0 0.0
        %v899 = vand.u32 %v420, 4294901760
        %900 = vmatmul.mubr.f32.gmra.mrb[0].mxu0 %v899
        %v901 = vpop.f32.mrb[0].mxu0
        %v902 = vadd.f32 %v806, %v901
        %v903 = vpop.f32.mrb[0].mxu0
        %904 = vmatprep.mubr.f32.mxu0 0.0
        %v905 = vand.u32 %v423, 4294901760
        %906 = vmatmul.mubr.f32.gmra.mrb[0].mxu0 %v905
        %v907 = vpop.f32.mrb[0].mxu0
        %v908 = vadd.f32 %v814, %v907
        %v909 = vpop.f32.mrb[0].mxu0
        %910 = vmatprep.mubr.f32.mxu0 0.0
        %v911 = vand.u32 %v426, 4294901760
        %912 = vmatmul.mubr.f32.gmra.mrb[0].mxu0 %v911
        %v913 = vpop.f32.mrb[0].mxu0
        %v914 = vadd.f32 %v822, %v913
        %v915 = vpop.f32.mrb[0].mxu0
        %916 = vdwg.mxu0
        %917 = vmatprep.subr.mxu0 0.0
        %v918 = vand.u32 %v430, 4294901760
        %919 = vmatpush1.msra.mxu0 %v918
        %920 = vmatprep.subr.mxu0 0.0
        %921 = vmatpush1.msra.mxu0 0.0
        %922 = vmatprep.subr.mxu0 0.0
        %923 = vmatpush1.msra.mxu0 0.0
        %924 = vmatprep.subr.mxu0 0.0
        %925 = vmatpush1.msra.mxu0 0.0
        %926 = vmatprep.subr.mxu0 0.0
        %927 = vmatpush1.msra.mxu0 0.0
        %928 = vmatprep.subr.mxu0 0.0
        %929 = vmatpush1.msra.mxu0 0.0
        %930 = vmatprep.subr.mxu0 0.0
        %931 = vmatpush1.msra.mxu0 0.0
        %932 = vmatprep.subr.mxu0 0.0
        %933 = vmatpush1.msra.mxu0 0.0
        %934 = vmatprep.subr.mxu0 0.0
        %935 = vmatpush1.msra.mxu0 0.0
        %936 = vmatprep.subr.mxu0 0.0
        %937 = vmatpush1.msra.mxu0 0.0
        %938 = vmatprep.subr.mxu0 0.0
        %939 = vmatpush1.msra.mxu0 0.0
        %940 = vmatprep.subr.mxu0 0.0
        %941 = vmatpush1.msra.mxu0 0.0
        %942 = vmatprep.subr.mxu0 0.0
        %943 = vmatpush1.msra.mxu0 0.0
        %944 = vmatprep.subr.mxu0 0.0
        %945 = vmatpush1.msra.mxu0 0.0
        %946 = vmatprep.subr.mxu0 0.0
        %947 = vmatpush1.msra.mxu0 0.0
        %948 = vmatprep.subr.mxu0 0.0
        %949 = vmatpush1.msra.mxu0 0.0
        %950 = vmatprep.subr.mxu0 0.0
        %951 = vmatpush1.msra.mxu0 0.0
        %952 = vmatprep.subr.mxu0 0.0
        %953 = vmatpush1.msra.mxu0 0.0
        %954 = vmatprep.subr.mxu0 0.0
        %955 = vmatpush1.msra.mxu0 0.0
        %956 = vmatprep.subr.mxu0 0.0
        %957 = vmatpush1.msra.mxu0 0.0
        %958 = vmatprep.subr.mxu0 0.0
        %959 = vmatpush1.msra.mxu0 0.0
        %960 = vmatprep.subr.mxu0 0.0
        %961 = vmatpush1.msra.mxu0 0.0
        %962 = vmatprep.subr.mxu0 0.0
        %963 = vmatpush1.msra.mxu0 0.0
        %964 = vmatprep.subr.mxu0 0.0
        %965 = vmatpush1.msra.mxu0 0.0
        %966 = vmatprep.subr.mxu0 0.0
        %967 = vmatpush1.msra.mxu0 0.0
        %968 = vmatprep.subr.mxu0 0.0
        %969 = vmatpush1.msra.mxu0 0.0
        %970 = vmatprep.subr.mxu0 0.0
        %971 = vmatpush1.msra.mxu0 0.0
        %972 = vmatprep.subr.mxu0 0.0
        %973 = vmatpush1.msra.mxu0 0.0
        %974 = vmatprep.subr.mxu0 0.0
        %975 = vmatpush1.msra.mxu0 0.0
        %976 = vmatprep.subr.mxu0 0.0
        %977 = vmatpush1.msra.mxu0 0.0
        %978 = vmatprep.subr.mxu0 0.0
        %979 = vmatpush1.msra.mxu0 0.0
        %980 = vmatprep.subr.mxu0 0.0
        %981 = vmatpush1.msra.mxu0 0.0
        %982 = vmatprep.mubr.f32.mxu0 0.0
        %v983 = vand.u32 %v417, 4294901760
        %984 = vmatmul.mubr.f32.gmra.mrb[0].mxu0 %v983
        %v985 = vpop.f32.mrb[0].mxu0
        %v986 = vadd.f32 %v896, %v985
        %v987 = vpop.f32.mrb[0].mxu0
        %988 = vmatprep.mubr.f32.mxu0 0.0
        %v989 = vand.u32 %v420, 4294901760
        %990 = vmatmul.mubr.f32.gmra.mrb[0].mxu0 %v989
        %v991 = vpop.f32.mrb[0].mxu0
        %v992 = vadd.f32 %v902, %v991
        %v993 = vpop.f32.mrb[0].mxu0
        %994 = vmatprep.mubr.f32.mxu0 0.0
        %v995 = vand.u32 %v423, 4294901760
        %996 = vmatmul.mubr.f32.gmra.mrb[0].mxu0 %v995
        %v997 = vpop.f32.mrb[0].mxu0
        %v998 = vadd.f32 %v908, %v997
        %v999 = vpop.f32.mrb[0].mxu0
        %1000 = vmatprep.mubr.f32.mxu0 0.0
        %v1001 = vand.u32 %v426, 4294901760
        %1002 = vmatmul.mubr.f32.gmra.mrb[0].mxu0 %v1001
        %v1003 = vpop.f32.mrb[0].mxu0
        %v1004 = vadd.f32 %v914, %v1003
        %v1005 = vpop.f32.mrb[0].mxu0
        %1006 = vdwg.mxu0
        %v1008 = vsel %vm415, %v384, 0
        %v1011 = vsel %vm415, %v385, 0
        %v1014 = vsel %vm415, %v386, 0
        %v1017 = vsel %vm415, %v387, 0
        %v1020 = vsel %vm428, %v393, 0
        %1022 = vmatprep.subr.mxu0 0.0
        %v1023 = vand.u32 %v1020, 4294901760
        %1024 = vmatpush1.msra.mxu0 %v1023
        %1025 = vmatprep.subr.mxu0 0.0
        %1026 = vmatpush1.msra.mxu0 0.0
        %1027 = vmatprep.subr.mxu0 0.0
        %1028 = vmatpush1.msra.mxu0 0.0
        %1029 = vmatprep.subr.mxu0 0.0
        %1030 = vmatpush1.msra.mxu0 0.0
        %1031 = vmatprep.subr.mxu0 0.0
        %1032 = vmatpush1.msra.mxu0 0.0
        %1033 = vmatprep.subr.mxu0 0.0
        %1034 = vmatpush1.msra.mxu0 0.0
        %1035 = vmatprep.subr.mxu0 0.0
        %1036 = vmatpush1.msra.mxu0 0.0
        %1037 = vmatprep.subr.mxu0 0.0
        %1038 = vmatpush1.msra.mxu0 0.0
        %1039 = vmatprep.subr.mxu0 0.0
        %1040 = vmatpush1.msra.mxu0 0.0
        %1041 = vmatprep.subr.mxu0 0.0
        %1042 = vmatpush1.msra.mxu0 0.0
        %1043 = vmatprep.subr.mxu0 0.0
        %1044 = vmatpush1.msra.mxu0 0.0
        %1045 = vmatprep.subr.mxu0 0.0
        %1046 = vmatpush1.msra.mxu0 0.0
        %1047 = vmatprep.subr.mxu0 0.0
        %1048 = vmatpush1.msra.mxu0 0.0
        %1049 = vmatprep.subr.mxu0 0.0
        %1050 = vmatpush1.msra.mxu0 0.0
        %1051 = vmatprep.subr.mxu0 0.0
        %1052 = vmatpush1.msra.mxu0 0.0
        %1053 = vmatprep.subr.mxu0 0.0
        %1054 = vmatpush1.msra.mxu0 0.0
        %1055 = vmatprep.subr.mxu0 0.0
        %1056 = vmatpush1.msra.mxu0 0.0
        %1057 = vmatprep.subr.mxu0 0.0
        %1058 = vmatpush1.msra.mxu0 0.0
        %1059 = vmatprep.subr.mxu0 0.0
        %1060 = vmatpush1.msra.mxu0 0.0
        %1061 = vmatprep.subr.mxu0 0.0
        %1062 = vmatpush1.msra.mxu0 0.0
        %1063 = vmatprep.subr.mxu0 0.0
        %1064 = vmatpush1.msra.mxu0 0.0
        %1065 = vmatprep.subr.mxu0 0.0
        %1066 = vmatpush1.msra.mxu0 0.0
        %1067 = vmatprep.subr.mxu0 0.0
        %1068 = vmatpush1.msra.mxu0 0.0
        %1069 = vmatprep.subr.mxu0 0.0
        %1070 = vmatpush1.msra.mxu0 0.0
        %1071 = vmatprep.subr.mxu0 0.0
        %1072 = vmatpush1.msra.mxu0 0.0
        %1073 = vmatprep.subr.mxu0 0.0
        %1074 = vmatpush1.msra.mxu0 0.0
        %1075 = vmatprep.subr.mxu0 0.0
        %1076 = vmatpush1.msra.mxu0 0.0
        %1077 = vmatprep.subr.mxu0 0.0
        %1078 = vmatpush1.msra.mxu0 0.0
        %1079 = vmatprep.subr.mxu0 0.0
        %1080 = vmatpush1.msra.mxu0 0.0
        %1081 = vmatprep.subr.mxu0 0.0
        %1082 = vmatpush1.msra.mxu0 0.0
        %1083 = vmatprep.subr.mxu0 0.0
        %1084 = vmatpush1.msra.mxu0 0.0
        %1085 = vmatprep.subr.mxu0 0.0
        %1086 = vmatpush1.msra.mxu0 0.0
        %1087 = vmatprep.mubr.f32.mxu0 0.0
        %v1088 = vand.u32 %v1008, 4294901760
        %v1089 = vsub.f32 %v1008, %v1088
        %v1090 = vand.u32 %v1089, 4294901760
        %v1091 = vsub.f32 %v1089, %v1090
        %v1092 = vand.u32 %v1091, 4294901760
        %1093 = vmatmul.mubr.f32.gmra.mrb[0].mxu0 %v1092
        %v1094 = vpop.f32.mrb[0].mxu0
        %v1095 = vadd.f32 0.0, %v1094
        %v1096 = vpop.f32.mrb[0].mxu0
        %1097 = vmatprep.mubr.f32.mxu0 0.0
        %v1098 = vand.u32 %v1011, 4294901760
        %v1099 = vsub.f32 %v1011, %v1098
        %v1100 = vand.u32 %v1099, 4294901760
        %v1101 = vsub.f32 %v1099, %v1100
        %v1102 = vand.u32 %v1101, 4294901760
        %1103 = vmatmul.mubr.f32.gmra.mrb[0].mxu0 %v1102
        %v1104 = vpop.f32.mrb[0].mxu0
        %v1105 = vadd.f32 0.0, %v1104
        %v1106 = vpop.f32.mrb[0].mxu0
        %1107 = vmatprep.mubr.f32.mxu0 0.0
        %v1108 = vand.u32 %v1014, 4294901760
        %v1109 = vsub.f32 %v1014, %v1108
        %v1110 = vand.u32 %v1109, 4294901760
        %v1111 = vsub.f32 %v1109, %v1110
        %v1112 = vand.u32 %v1111, 4294901760
        %1113 = vmatmul.mubr.f32.gmra.mrb[0].mxu0 %v1112
        %v1114 = vpop.f32.mrb[0].mxu0
        %v1115 = vadd.f32 0.0, %v1114
        %v1116 = vpop.f32.mrb[0].mxu0
        %1117 = vmatprep.mubr.f32.mxu0 0.0
        %v1118 = vand.u32 %v1017, 4294901760
        %v1119 = vsub.f32 %v1017, %v1118
        %v1120 = vand.u32 %v1119, 4294901760
        %v1121 = vsub.f32 %v1119, %v1120
        %v1122 = vand.u32 %v1121, 4294901760
        %1123 = vmatmul.mubr.f32.gmra.mrb[0].mxu0 %v1122
        %v1124 = vpop.f32.mrb[0].mxu0
        %v1125 = vadd.f32 0.0, %v1124
        %v1126 = vpop.f32.mrb[0].mxu0
        %1127 = vdwg.mxu0
        %1128 = vmatprep.subr.mxu0 0.0
        %v1129 = vand.u32 %v1020, 4294901760
        %v1130 = vsub.f32 %v1020, %v1129
        %v1131 = vand.u32 %v1130, 4294901760
        %v1132 = vsub.f32 %v1130, %v1131
        %v1133 = vand.u32 %v1132, 4294901760
        %1134 = vmatpush1.msra.mxu0 %v1133
        %1135 = vmatprep.subr.mxu0 0.0
        %1136 = vmatpush1.msra.mxu0 0.0
        %1137 = vmatprep.subr.mxu0 0.0
        %1138 = vmatpush1.msra.mxu0 0.0
        %1139 = vmatprep.subr.mxu0 0.0
        %1140 = vmatpush1.msra.mxu0 0.0
        %1141 = vmatprep.subr.mxu0 0.0
        %1142 = vmatpush1.msra.mxu0 0.0
        %1143 = vmatprep.subr.mxu0 0.0
        %1144 = vmatpush1.msra.mxu0 0.0
        %1145 = vmatprep.subr.mxu0 0.0
        %1146 = vmatpush1.msra.mxu0 0.0
        %1147 = vmatprep.subr.mxu0 0.0
        %1148 = vmatpush1.msra.mxu0 0.0
        %1149 = vmatprep.subr.mxu0 0.0
        %1150 = vmatpush1.msra.mxu0 0.0
        %1151 = vmatprep.subr.mxu0 0.0
        %1152 = vmatpush1.msra.mxu0 0.0
        %1153 = vmatprep.subr.mxu0 0.0
        %1154 = vmatpush1.msra.mxu0 0.0
        %1155 = vmatprep.subr.mxu0 0.0
        %1156 = vmatpush1.msra.mxu0 0.0
        %1157 = vmatprep.subr.mxu0 0.0
        %1158 = vmatpush1.msra.mxu0 0.0
        %1159 = vmatprep.subr.mxu0 0.0
        %1160 = vmatpush1.msra.mxu0 0.0
        %1161 = vmatprep.subr.mxu0 0.0
        %1162 = vmatpush1.msra.mxu0 0.0
        %1163 = vmatprep.subr.mxu0 0.0
        %1164 = vmatpush1.msra.mxu0 0.0
        %1165 = vmatprep.subr.mxu0 0.0
        %1166 = vmatpush1.msra.mxu0 0.0
        %1167 = vmatprep.subr.mxu0 0.0
        %1168 = vmatpush1.msra.mxu0 0.0
        %1169 = vmatprep.subr.mxu0 0.0
        %1170 = vmatpush1.msra.mxu0 0.0
        %1171 = vmatprep.subr.mxu0 0.0
        %1172 = vmatpush1.msra.mxu0 0.0
        %1173 = vmatprep.subr.mxu0 0.0
        %1174 = vmatpush1.msra.mxu0 0.0
        %1175 = vmatprep.subr.mxu0 0.0
        %1176 = vmatpush1.msra.mxu0 0.0
        %1177 = vmatprep.subr.mxu0 0.0
        %1178 = vmatpush1.msra.mxu0 0.0
        %1179 = vmatprep.subr.mxu0 0.0
        %1180 = vmatpush1.msra.mxu0 0.0
        %1181 = vmatprep.subr.mxu0 0.0
        %1182 = vmatpush1.msra.mxu0 0.0
        %1183 = vmatprep.subr.mxu0 0.0
        %1184 = vmatpush1.msra.mxu0 0.0
        %1185 = vmatprep.subr.mxu0 0.0
        %1186 = vmatpush1.msra.mxu0 0.0
        %1187 = vmatprep.subr.mxu0 0.0
        %1188 = vmatpush1.msra.mxu0 0.0
        %1189 = vmatprep.subr.mxu0 0.0
        %1190 = vmatpush1.msra.mxu0 0.0
        %1191 = vmatprep.subr.mxu0 0.0
        %1192 = vmatpush1.msra.mxu0 0.0
        %1193 = vmatprep.subr.mxu0 0.0
        %1194 = vmatpush1.msra.mxu0 0.0
        %1195 = vmatprep.subr.mxu0 0.0
        %1196 = vmatpush1.msra.mxu0 0.0
        %1197 = vmatprep.mubr.f32.mxu0 0.0
        %v1198 = vand.u32 %v1008, 4294901760
        %1199 = vmatmul.mubr.f32.gmra.mrb[0].mxu0 %v1198
        %v1200 = vpop.f32.mrb[0].mxu0
        %v1201 = vadd.f32 %v1095, %v1200
        %v1202 = vpop.f32.mrb[0].mxu0
        %1203 = vmatprep.mubr.f32.mxu0 0.0
        %v1204 = vand.u32 %v1011, 4294901760
        %1205 = vmatmul.mubr.f32.gmra.mrb[0].mxu0 %v1204
        %v1206 = vpop.f32.mrb[0].mxu0
        %v1207 = vadd.f32 %v1105, %v1206
        %v1208 = vpop.f32.mrb[0].mxu0
        %1209 = vmatprep.mubr.f32.mxu0 0.0
        %v1210 = vand.u32 %v1014, 4294901760
        %1211 = vmatmul.mubr.f32.gmra.mrb[0].mxu0 %v1210
        %v1212 = vpop.f32.mrb[0].mxu0
        %v1213 = vadd.f32 %v1115, %v1212
        %v1214 = vpop.f32.mrb[0].mxu0
        %1215 = vmatprep.mubr.f32.mxu0 0.0
        %v1216 = vand.u32 %v1017, 4294901760
        %1217 = vmatmul.mubr.f32.gmra.mrb[0].mxu0 %v1216
        %v1218 = vpop.f32.mrb[0].mxu0
        %v1219 = vadd.f32 %v1125, %v1218
        %v1220 = vpop.f32.mrb[0].mxu0
        %1221 = vdwg.mxu0
        %1222 = vmatprep.subr.mxu0 0.0
        %v1223 = vand.u32 %v1020, 4294901760
        %v1224 = vsub.f32 %v1020, %v1223
        %1225 = vmatpush1.msra.mxu0 %v1224
        %1226 = vmatprep.subr.mxu0 0.0
        %1227 = vmatpush1.msra.mxu0 0.0
        %1228 = vmatprep.subr.mxu0 0.0
        %1229 = vmatpush1.msra.mxu0 0.0
        %1230 = vmatprep.subr.mxu0 0.0
        %1231 = vmatpush1.msra.mxu0 0.0
        %1232 = vmatprep.subr.mxu0 0.0
        %1233 = vmatpush1.msra.mxu0 0.0
        %1234 = vmatprep.subr.mxu0 0.0
        %1235 = vmatpush1.msra.mxu0 0.0
        %1236 = vmatprep.subr.mxu0 0.0
        %1237 = vmatpush1.msra.mxu0 0.0
        %1238 = vmatprep.subr.mxu0 0.0
        %1239 = vmatpush1.msra.mxu0 0.0
        %1240 = vmatprep.subr.mxu0 0.0
        %1241 = vmatpush1.msra.mxu0 0.0
        %1242 = vmatprep.subr.mxu0 0.0
        %1243 = vmatpush1.msra.mxu0 0.0
        %1244 = vmatprep.subr.mxu0 0.0
        %1245 = vmatpush1.msra.mxu0 0.0
        %1246 = vmatprep.subr.mxu0 0.0
        %1247 = vmatpush1.msra.mxu0 0.0
        %1248 = vmatprep.subr.mxu0 0.0
        %1249 = vmatpush1.msra.mxu0 0.0
        %1250 = vmatprep.subr.mxu0 0.0
        %1251 = vmatpush1.msra.mxu0 0.0
        %1252 = vmatprep.subr.mxu0 0.0
        %1253 = vmatpush1.msra.mxu0 0.0
        %1254 = vmatprep.subr.mxu0 0.0
        %1255 = vmatpush1.msra.mxu0 0.0
        %1256 = vmatprep.subr.mxu0 0.0
        %1257 = vmatpush1.msra.mxu0 0.0
        %1258 = vmatprep.subr.mxu0 0.0
        %1259 = vmatpush1.msra.mxu0 0.0
        %1260 = vmatprep.subr.mxu0 0.0
        %1261 = vmatpush1.msra.mxu0 0.0
        %1262 = vmatprep.subr.mxu0 0.0
        %1263 = vmatpush1.msra.mxu0 0.0
        %1264 = vmatprep.subr.mxu0 0.0
        %1265 = vmatpush1.msra.mxu0 0.0
        %1266 = vmatprep.subr.mxu0 0.0
        %1267 = vmatpush1.msra.mxu0 0.0
        %1268 = vmatprep.subr.mxu0 0.0
        %1269 = vmatpush1.msra.mxu0 0.0
        %1270 = vmatprep.subr.mxu0 0.0
        %1271 = vmatpush1.msra.mxu0 0.0
        %1272 = vmatprep.subr.mxu0 0.0
        %1273 = vmatpush1.msra.mxu0 0.0
        %1274 = vmatprep.subr.mxu0 0.0
        %1275 = vmatpush1.msra.mxu0 0.0
        %1276 = vmatprep.subr.mxu0 0.0
        %1277 = vmatpush1.msra.mxu0 0.0
        %1278 = vmatprep.subr.mxu0 0.0
        %1279 = vmatpush1.msra.mxu0 0.0
        %1280 = vmatprep.subr.mxu0 0.0
        %1281 = vmatpush1.msra.mxu0 0.0
        %1282 = vmatprep.subr.mxu0 0.0
        %1283 = vmatpush1.msra.mxu0 0.0
        %1284 = vmatprep.subr.mxu0 0.0
        %1285 = vmatpush1.msra.mxu0 0.0
        %1286 = vmatprep.subr.mxu0 0.0
        %1287 = vmatpush1.msra.mxu0 0.0
        %1288 = vmatprep.mubr.f32.mxu0 0.0
        %v1289 = vand.u32 %v1008, 4294901760
        %v1290 = vsub.f32 %v1008, %v1289
        %1291 = vmatmul.mubr.f32.gmra.mrb[0].mxu0 %v1290
        %v1292 = vpop.f32.mrb[0].mxu0
        %v1293 = vadd.f32 %v1201, %v1292
        %v1294 = vpop.f32.mrb[0].mxu0
        %1295 = vmatprep.mubr.f32.mxu0 0.0
        %v1296 = vand.u32 %v1011, 4294901760
        %v1297 = vsub.f32 %v1011, %v1296
        %1298 = vmatmul.mubr.f32.gmra.mrb[0].mxu0 %v1297
        %v1299 = vpop.f32.mrb[0].mxu0
        %v1300 = vadd.f32 %v1207, %v1299
        %v1301 = vpop.f32.mrb[0].mxu0
        %1302 = vmatprep.mubr.f32.mxu0 0.0
        %v1303 = vand.u32 %v1014, 4294901760
        %v1304 = vsub.f32 %v1014, %v1303
        %1305 = vmatmul.mubr.f32.gmra.mrb[0].mxu0 %v1304
        %v1306 = vpop.f32.mrb[0].mxu0
        %v1307 = vadd.f32 %v1213, %v1306
        %v1308 = vpop.f32.mrb[0].mxu0
        %1309 = vmatprep.mubr.f32.mxu0 0.0
        %v1310 = vand.u32 %v1017, 4294901760
        %v1311 = vsub.f32 %v1017, %v1310
        %1312 = vmatmul.mubr.f32.gmra.mrb[0].mxu0 %v1311
        %v1313 = vpop.f32.mrb[0].mxu0
        %v1314 = vadd.f32 %v1219, %v1313
        %v1315 = vpop.f32.mrb[0].mxu0
        %1316 = vdwg.mxu0
        %1317 = vmatprep.subr.mxu0 0.0
        %v1318 = vand.u32 %v1020, 4294901760
        %1319 = vmatpush1.msra.mxu0 %v1318
        %1320 = vmatprep.subr.mxu0 0.0
        %1321 = vmatpush1.msra.mxu0 0.0
        %1322 = vmatprep.subr.mxu0 0.0
        %1323 = vmatpush1.msra.mxu0 0.0
        %1324 = vmatprep.subr.mxu0 0.0
        %1325 = vmatpush1.msra.mxu0 0.0
        %1326 = vmatprep.subr.mxu0 0.0
        %1327 = vmatpush1.msra.mxu0 0.0
        %1328 = vmatprep.subr.mxu0 0.0
        %1329 = vmatpush1.msra.mxu0 0.0
        %1330 = vmatprep.subr.mxu0 0.0
        %1331 = vmatpush1.msra.mxu0 0.0
        %1332 = vmatprep.subr.mxu0 0.0
        %1333 = vmatpush1.msra.mxu0 0.0
        %1334 = vmatprep.subr.mxu0 0.0
        %1335 = vmatpush1.msra.mxu0 0.0
        %1336 = vmatprep.subr.mxu0 0.0
        %1337 = vmatpush1.msra.mxu0 0.0
        %1338 = vmatprep.subr.mxu0 0.0
        %1339 = vmatpush1.msra.mxu0 0.0
        %1340 = vmatprep.subr.mxu0 0.0
        %1341 = vmatpush1.msra.mxu0 0.0
        %1342 = vmatprep.subr.mxu0 0.0
        %1343 = vmatpush1.msra.mxu0 0.0
        %1344 = vmatprep.subr.mxu0 0.0
        %1345 = vmatpush1.msra.mxu0 0.0
        %1346 = vmatprep.subr.mxu0 0.0
        %1347 = vmatpush1.msra.mxu0 0.0
        %1348 = vmatprep.subr.mxu0 0.0
        %1349 = vmatpush1.msra.mxu0 0.0
        %1350 = vmatprep.subr.mxu0 0.0
        %1351 = vmatpush1.msra.mxu0 0.0
        %1352 = vmatprep.subr.mxu0 0.0
        %1353 = vmatpush1.msra.mxu0 0.0
        %1354 = vmatprep.subr.mxu0 0.0
        %1355 = vmatpush1.msra.mxu0 0.0
        %1356 = vmatprep.subr.mxu0 0.0
        %1357 = vmatpush1.msra.mxu0 0.0
        %1358 = vmatprep.subr.mxu0 0.0
        %1359 = vmatpush1.msra.mxu0 0.0
        %1360 = vmatprep.subr.mxu0 0.0
        %1361 = vmatpush1.msra.mxu0 0.0
        %1362 = vmatprep.subr.mxu0 0.0
        %1363 = vmatpush1.msra.mxu0 0.0
        %1364 = vmatprep.subr.mxu0 0.0
        %1365 = vmatpush1.msra.mxu0 0.0
        %1366 = vmatprep.subr.mxu0 0.0
        %1367 = vmatpush1.msra.mxu0 0.0
        %1368 = vmatprep.subr.mxu0 0.0
        %1369 = vmatpush1.msra.mxu0 0.0
        %1370 = vmatprep.subr.mxu0 0.0
        %1371 = vmatpush1.msra.mxu0 0.0
        %1372 = vmatprep.subr.mxu0 0.0
        %1373 = vmatpush1.msra.mxu0 0.0
        %1374 = vmatprep.subr.mxu0 0.0
        %1375 = vmatpush1.msra.mxu0 0.0
        %1376 = vmatprep.subr.mxu0 0.0
        %1377 = vmatpush1.msra.mxu0 0.0
        %1378 = vmatprep.subr.mxu0 0.0
        %1379 = vmatpush1.msra.mxu0 0.0
        %1380 = vmatprep.subr.mxu0 0.0
        %1381 = vmatpush1.msra.mxu0 0.0
        %1382 = vmatprep.mubr.f32.mxu0 0.0
        %v1383 = vand.u32 %v1008, 4294901760
        %v1384 = vsub.f32 %v1008, %v1383
        %v1385 = vand.u32 %v1384, 4294901760
        %1386 = vmatmul.mubr.f32.gmra.mrb[0].mxu0 %v1385
        %v1387 = vpop.f32.mrb[0].mxu0
        %v1388 = vadd.f32 %v1293, %v1387
        %v1389 = vpop.f32.mrb[0].mxu0
        %1390 = vmatprep.mubr.f32.mxu0 0.0
        %v1391 = vand.u32 %v1011, 4294901760
        %v1392 = vsub.f32 %v1011, %v1391
        %v1393 = vand.u32 %v1392, 4294901760
        %1394 = vmatmul.mubr.f32.gmra.mrb[0].mxu0 %v1393
        %v1395 = vpop.f32.mrb[0].mxu0
        %v1396 = vadd.f32 %v1300, %v1395
        %v1397 = vpop.f32.mrb[0].mxu0
        %1398 = vmatprep.mubr.f32.mxu0 0.0
        %v1399 = vand.u32 %v1014, 4294901760
        %v1400 = vsub.f32 %v1014, %v1399
        %v1401 = vand.u32 %v1400, 4294901760
        %1402 = vmatmul.mubr.f32.gmra.mrb[0].mxu0 %v1401
        %v1403 = vpop.f32.mrb[0].mxu0
        %v1404 = vadd.f32 %v1307, %v1403
        %v1405 = vpop.f32.mrb[0].mxu0
        %1406 = vmatprep.mubr.f32.mxu0 0.0
        %v1407 = vand.u32 %v1017, 4294901760
        %v1408 = vsub.f32 %v1017, %v1407
        %v1409 = vand.u32 %v1408, 4294901760
        %1410 = vmatmul.mubr.f32.gmra.mrb[0].mxu0 %v1409
        %v1411 = vpop.f32.mrb[0].mxu0
        %v1412 = vadd.f32 %v1314, %v1411
        %v1413 = vpop.f32.mrb[0].mxu0
        %1414 = vdwg.mxu0
        %1415 = vmatprep.subr.mxu0 0.0
        %v1416 = vand.u32 %v1020, 4294901760
        %v1417 = vsub.f32 %v1020, %v1416
        %v1418 = vand.u32 %v1417, 4294901760
        %1419 = vmatpush1.msra.mxu0 %v1418
        %1420 = vmatprep.subr.mxu0 0.0
        %1421 = vmatpush1.msra.mxu0 0.0
        %1422 = vmatprep.subr.mxu0 0.0
        %1423 = vmatpush1.msra.mxu0 0.0
        %1424 = vmatprep.subr.mxu0 0.0
        %1425 = vmatpush1.msra.mxu0 0.0
        %1426 = vmatprep.subr.mxu0 0.0
        %1427 = vmatpush1.msra.mxu0 0.0
        %1428 = vmatprep.subr.mxu0 0.0
        %1429 = vmatpush1.msra.mxu0 0.0
        %1430 = vmatprep.subr.mxu0 0.0
        %1431 = vmatpush1.msra.mxu0 0.0
        %1432 = vmatprep.subr.mxu0 0.0
        %1433 = vmatpush1.msra.mxu0 0.0
        %1434 = vmatprep.subr.mxu0 0.0
        %1435 = vmatpush1.msra.mxu0 0.0
        %1436 = vmatprep.subr.mxu0 0.0
        %1437 = vmatpush1.msra.mxu0 0.0
        %1438 = vmatprep.subr.mxu0 0.0
        %1439 = vmatpush1.msra.mxu0 0.0
        %1440 = vmatprep.subr.mxu0 0.0
        %1441 = vmatpush1.msra.mxu0 0.0
        %1442 = vmatprep.subr.mxu0 0.0
        %1443 = vmatpush1.msra.mxu0 0.0
        %1444 = vmatprep.subr.mxu0 0.0
        %1445 = vmatpush1.msra.mxu0 0.0
        %1446 = vmatprep.subr.mxu0 0.0
        %1447 = vmatpush1.msra.mxu0 0.0
        %1448 = vmatprep.subr.mxu0 0.0
        %1449 = vmatpush1.msra.mxu0 0.0
        %1450 = vmatprep.subr.mxu0 0.0
        %1451 = vmatpush1.msra.mxu0 0.0
        %1452 = vmatprep.subr.mxu0 0.0
        %1453 = vmatpush1.msra.mxu0 0.0
        %1454 = vmatprep.subr.mxu0 0.0
        %1455 = vmatpush1.msra.mxu0 0.0
        %1456 = vmatprep.subr.mxu0 0.0
        %1457 = vmatpush1.msra.mxu0 0.0
        %1458 = vmatprep.subr.mxu0 0.0
        %1459 = vmatpush1.msra.mxu0 0.0
        %1460 = vmatprep.subr.mxu0 0.0
        %1461 = vmatpush1.msra.mxu0 0.0
        %1462 = vmatprep.subr.mxu0 0.0
        %1463 = vmatpush1.msra.mxu0 0.0
        %1464 = vmatprep.subr.mxu0 0.0
        %1465 = vmatpush1.msra.mxu0 0.0
        %1466 = vmatprep.subr.mxu0 0.0
        %1467 = vmatpush1.msra.mxu0 0.0
        %1468 = vmatprep.subr.mxu0 0.0
        %1469 = vmatpush1.msra.mxu0 0.0
        %1470 = vmatprep.subr.mxu0 0.0
        %1471 = vmatpush1.msra.mxu0 0.0
        %1472 = vmatprep.subr.mxu0 0.0
        %1473 = vmatpush1.msra.mxu0 0.0
        %1474 = vmatprep.subr.mxu0 0.0
        %1475 = vmatpush1.msra.mxu0 0.0
        %1476 = vmatprep.subr.mxu0 0.0
        %1477 = vmatpush1.msra.mxu0 0.0
        %1478 = vmatprep.subr.mxu0 0.0
        %1479 = vmatpush1.msra.mxu0 0.0
        %1480 = vmatprep.subr.mxu0 0.0
        %1481 = vmatpush1.msra.mxu0 0.0
        %1482 = vmatprep.mubr.f32.mxu0 0.0
        %v1483 = vand.u32 %v1008, 4294901760
        %1484 = vmatmul.mubr.f32.gmra.mrb[0].mxu0 %v1483
        %v1485 = vpop.f32.mrb[0].mxu0
        %v1486 = vadd.f32 %v1388, %v1485
        %v1487 = vpop.f32.mrb[0].mxu0
        %1488 = vmatprep.mubr.f32.mxu0 0.0
        %v1489 = vand.u32 %v1011, 4294901760
        %1490 = vmatmul.mubr.f32.gmra.mrb[0].mxu0 %v1489
        %v1491 = vpop.f32.mrb[0].mxu0
        %v1492 = vadd.f32 %v1396, %v1491
        %v1493 = vpop.f32.mrb[0].mxu0
        %1494 = vmatprep.mubr.f32.mxu0 0.0
        %v1495 = vand.u32 %v1014, 4294901760
        %1496 = vmatmul.mubr.f32.gmra.mrb[0].mxu0 %v1495
        %v1497 = vpop.f32.mrb[0].mxu0
        %v1498 = vadd.f32 %v1404, %v1497
        %v1499 = vpop.f32.mrb[0].mxu0
        %1500 = vmatprep.mubr.f32.mxu0 0.0
        %v1501 = vand.u32 %v1017, 4294901760
        %1502 = vmatmul.mubr.f32.gmra.mrb[0].mxu0 %v1501
        %v1503 = vpop.f32.mrb[0].mxu0
        %v1504 = vadd.f32 %v1412, %v1503
        %v1505 = vpop.f32.mrb[0].mxu0
        %1506 = vdwg.mxu0
        %1507 = vmatprep.subr.mxu0 0.0
        %v1508 = vand.u32 %v1020, 4294901760
        %1509 = vmatpush1.msra.mxu0 %v1508
        %1510 = vmatprep.subr.mxu0 0.0
        %1511 = vmatpush1.msra.mxu0 0.0
        %1512 = vmatprep.subr.mxu0 0.0
        %1513 = vmatpush1.msra.mxu0 0.0
        %1514 = vmatprep.subr.mxu0 0.0
        %1515 = vmatpush1.msra.mxu0 0.0
        %1516 = vmatprep.subr.mxu0 0.0
        %1517 = vmatpush1.msra.mxu0 0.0
        %1518 = vmatprep.subr.mxu0 0.0
        %1519 = vmatpush1.msra.mxu0 0.0
        %1520 = vmatprep.subr.mxu0 0.0
        %1521 = vmatpush1.msra.mxu0 0.0
        %1522 = vmatprep.subr.mxu0 0.0
        %1523 = vmatpush1.msra.mxu0 0.0
        %1524 = vmatprep.subr.mxu0 0.0
        %1525 = vmatpush1.msra.mxu0 0.0
        %1526 = vmatprep.subr.mxu0 0.0
        %1527 = vmatpush1.msra.mxu0 0.0
        %1528 = vmatprep.subr.mxu0 0.0
        %1529 = vmatpush1.msra.mxu0 0.0
        %1530 = vmatprep.subr.mxu0 0.0
        %1531 = vmatpush1.msra.mxu0 0.0
        %1532 = vmatprep.subr.mxu0 0.0
        %1533 = vmatpush1.msra.mxu0 0.0
        %1534 = vmatprep.subr.mxu0 0.0
        %1535 = vmatpush1.msra.mxu0 0.0
        %1536 = vmatprep.subr.mxu0 0.0
        %1537 = vmatpush1.msra.mxu0 0.0
        %1538 = vmatprep.subr.mxu0 0.0
        %1539 = vmatpush1.msra.mxu0 0.0
        %1540 = vmatprep.subr.mxu0 0.0
        %1541 = vmatpush1.msra.mxu0 0.0
        %1542 = vmatprep.subr.mxu0 0.0
        %1543 = vmatpush1.msra.mxu0 0.0
        %1544 = vmatprep.subr.mxu0 0.0
        %1545 = vmatpush1.msra.mxu0 0.0
        %1546 = vmatprep.subr.mxu0 0.0
        %1547 = vmatpush1.msra.mxu0 0.0
        %1548 = vmatprep.subr.mxu0 0.0
        %1549 = vmatpush1.msra.mxu0 0.0
        %1550 = vmatprep.subr.mxu0 0.0
        %1551 = vmatpush1.msra.mxu0 0.0
        %1552 = vmatprep.subr.mxu0 0.0
        %1553 = vmatpush1.msra.mxu0 0.0
        %1554 = vmatprep.subr.mxu0 0.0
        %1555 = vmatpush1.msra.mxu0 0.0
        %1556 = vmatprep.subr.mxu0 0.0
        %1557 = vmatpush1.msra.mxu0 0.0
        %1558 = vmatprep.subr.mxu0 0.0
        %1559 = vmatpush1.msra.mxu0 0.0
        %1560 = vmatprep.subr.mxu0 0.0
        %1561 = vmatpush1.msra.mxu0 0.0
        %1562 = vmatprep.subr.mxu0 0.0
        %1563 = vmatpush1.msra.mxu0 0.0
        %1564 = vmatprep.subr.mxu0 0.0
        %1565 = vmatpush1.msra.mxu0 0.0
        %1566 = vmatprep.subr.mxu0 0.0
        %1567 = vmatpush1.msra.mxu0 0.0
        %1568 = vmatprep.subr.mxu0 0.0
        %1569 = vmatpush1.msra.mxu0 0.0
        %1570 = vmatprep.subr.mxu0 0.0
        %1571 = vmatpush1.msra.mxu0 0.0
        %1572 = vmatprep.mubr.f32.mxu0 0.0
        %v1573 = vand.u32 %v1008, 4294901760
        %1574 = vmatmul.mubr.f32.gmra.mrb[0].mxu0 %v1573
        %v1575 = vpop.f32.mrb[0].mxu0
        %v1576 = vadd.f32 %v1486, %v1575
        %v1577 = vpop.f32.mrb[0].mxu0
        %1578 = vmatprep.mubr.f32.mxu0 0.0
        %v1579 = vand.u32 %v1011, 4294901760
        %1580 = vmatmul.mubr.f32.gmra.mrb[0].mxu0 %v1579
        %v1581 = vpop.f32.mrb[0].mxu0
        %v1582 = vadd.f32 %v1492, %v1581
        %v1583 = vpop.f32.mrb[0].mxu0
        %1584 = vmatprep.mubr.f32.mxu0 0.0
        %v1585 = vand.u32 %v1014, 4294901760
        %1586 = vmatmul.mubr.f32.gmra.mrb[0].mxu0 %v1585
        %v1587 = vpop.f32.mrb[0].mxu0
        %v1588 = vadd.f32 %v1498, %v1587
        %v1589 = vpop.f32.mrb[0].mxu0
        %1590 = vmatprep.mubr.f32.mxu0 0.0
        %v1591 = vand.u32 %v1017, 4294901760
        %1592 = vmatmul.mubr.f32.gmra.mrb[0].mxu0 %v1591
        %v1593 = vpop.f32.mrb[0].mxu0
        %v1594 = vadd.f32 %v1504, %v1593
        %v1595 = vpop.f32.mrb[0].mxu0
        %1596 = vdwg.mxu0
        %v1598 = vsel %vm415, %v388, 0
        %1600 = vmatprep.subr.mxu0 0.0
        %v1601 = vand.u32 %v1020, 4294901760
        %1602 = vmatpush1.msra.mxu0 %v1601
        %1603 = vmatprep.subr.mxu0 0.0
        %1604 = vmatpush1.msra.mxu0 0.0
        %1605 = vmatprep.subr.mxu0 0.0
        %1606 = vmatpush1.msra.mxu0 0.0
        %1607 = vmatprep.subr.mxu0 0.0
        %1608 = vmatpush1.msra.mxu0 0.0
        %1609 = vmatprep.subr.mxu0 0.0
        %1610 = vmatpush1.msra.mxu0 0.0
        %1611 = vmatprep.subr.mxu0 0.0
        %1612 = vmatpush1.msra.mxu0 0.0
        %1613 = vmatprep.subr.mxu0 0.0
        %1614 = vmatpush1.msra.mxu0 0.0
        %1615 = vmatprep.subr.mxu0 0.0
        %1616 = vmatpush1.msra.mxu0 0.0
        %1617 = vmatprep.subr.mxu0 0.0
        %1618 = vmatpush1.msra.mxu0 0.0
        %1619 = vmatprep.subr.mxu0 0.0
        %1620 = vmatpush1.msra.mxu0 0.0
        %1621 = vmatprep.subr.mxu0 0.0
        %1622 = vmatpush1.msra.mxu0 0.0
        %1623 = vmatprep.subr.mxu0 0.0
        %1624 = vmatpush1.msra.mxu0 0.0
        %1625 = vmatprep.subr.mxu0 0.0
        %1626 = vmatpush1.msra.mxu0 0.0
        %1627 = vmatprep.subr.mxu0 0.0
        %1628 = vmatpush1.msra.mxu0 0.0
        %1629 = vmatprep.subr.mxu0 0.0
        %1630 = vmatpush1.msra.mxu0 0.0
        %1631 = vmatprep.subr.mxu0 0.0
        %1632 = vmatpush1.msra.mxu0 0.0
        %1633 = vmatprep.subr.mxu0 0.0
        %1634 = vmatpush1.msra.mxu0 0.0
        %1635 = vmatprep.subr.mxu0 0.0
        %1636 = vmatpush1.msra.mxu0 0.0
        %1637 = vmatprep.subr.mxu0 0.0
        %1638 = vmatpush1.msra.mxu0 0.0
        %1639 = vmatprep.subr.mxu0 0.0
        %1640 = vmatpush1.msra.mxu0 0.0
        %1641 = vmatprep.subr.mxu0 0.0
        %1642 = vmatpush1.msra.mxu0 0.0
        %1643 = vmatprep.subr.mxu0 0.0
        %1644 = vmatpush1.msra.mxu0 0.0
        %1645 = vmatprep.subr.mxu0 0.0
        %1646 = vmatpush1.msra.mxu0 0.0
        %1647 = vmatprep.subr.mxu0 0.0
        %1648 = vmatpush1.msra.mxu0 0.0
        %1649 = vmatprep.subr.mxu0 0.0
        %1650 = vmatpush1.msra.mxu0 0.0
        %1651 = vmatprep.subr.mxu0 0.0
        %1652 = vmatpush1.msra.mxu0 0.0
        %1653 = vmatprep.subr.mxu0 0.0
        %1654 = vmatpush1.msra.mxu0 0.0
        %1655 = vmatprep.subr.mxu0 0.0
        %1656 = vmatpush1.msra.mxu0 0.0
        %1657 = vmatprep.subr.mxu0 0.0
        %1658 = vmatpush1.msra.mxu0 0.0
        %1659 = vmatprep.subr.mxu0 0.0
        %1660 = vmatpush1.msra.mxu0 0.0
        %1661 = vmatprep.subr.mxu0 0.0
        %1662 = vmatpush1.msra.mxu0 0.0
        %1663 = vmatprep.subr.mxu0 0.0
        %1664 = vmatpush1.msra.mxu0 0.0
        %1665 = vmatprep.mubr.f32.mxu0 0.0
        %v1666 = vand.u32 %v1598, 4294901760
        %v1667 = vsub.f32 %v1598, %v1666
        %v1668 = vand.u32 %v1667, 4294901760
        %v1669 = vsub.f32 %v1667, %v1668
        %v1670 = vand.u32 %v1669, 4294901760
        %1671 = vmatmul.mubr.f32.gmra.mrb[0].mxu0 %v1670
        %v1672 = vpop.f32.mrb[0].mxu0
        %v1673 = vadd.f32 0.0, %v1672
        %v1674 = vpop.f32.mrb[0].mxu0
        %1675 = vdwg.mxu0
        %1676 = vmatprep.subr.mxu0 0.0
        %v1677 = vand.u32 %v1020, 4294901760
        %v1678 = vsub.f32 %v1020, %v1677
        %v1679 = vand.u32 %v1678, 4294901760
        %v1680 = vsub.f32 %v1678, %v1679
        %v1681 = vand.u32 %v1680, 4294901760
        %1682 = vmatpush1.msra.mxu0 %v1681
        %1683 = vmatprep.subr.mxu0 0.0
        %1684 = vmatpush1.msra.mxu0 0.0
        %1685 = vmatprep.subr.mxu0 0.0
        %1686 = vmatpush1.msra.mxu0 0.0
        %1687 = vmatprep.subr.mxu0 0.0
        %1688 = vmatpush1.msra.mxu0 0.0
        %1689 = vmatprep.subr.mxu0 0.0
        %1690 = vmatpush1.msra.mxu0 0.0
        %1691 = vmatprep.subr.mxu0 0.0
        %1692 = vmatpush1.msra.mxu0 0.0
        %1693 = vmatprep.subr.mxu0 0.0
        %1694 = vmatpush1.msra.mxu0 0.0
        %1695 = vmatprep.subr.mxu0 0.0
        %1696 = vmatpush1.msra.mxu0 0.0
        %1697 = vmatprep.subr.mxu0 0.0
        %1698 = vmatpush1.msra.mxu0 0.0
        %1699 = vmatprep.subr.mxu0 0.0
        %1700 = vmatpush1.msra.mxu0 0.0
        %1701 = vmatprep.subr.mxu0 0.0
        %1702 = vmatpush1.msra.mxu0 0.0
        %1703 = vmatprep.subr.mxu0 0.0
        %1704 = vmatpush1.msra.mxu0 0.0
        %1705 = vmatprep.subr.mxu0 0.0
        %1706 = vmatpush1.msra.mxu0 0.0
        %1707 = vmatprep.subr.mxu0 0.0
        %1708 = vmatpush1.msra.mxu0 0.0
        %1709 = vmatprep.subr.mxu0 0.0
        %1710 = vmatpush1.msra.mxu0 0.0
        %1711 = vmatprep.subr.mxu0 0.0
        %1712 = vmatpush1.msra.mxu0 0.0
        %1713 = vmatprep.subr.mxu0 0.0
        %1714 = vmatpush1.msra.mxu0 0.0
        %1715 = vmatprep.subr.mxu0 0.0
        %1716 = vmatpush1.msra.mxu0 0.0
        %1717 = vmatprep.subr.mxu0 0.0
        %1718 = vmatpush1.msra.mxu0 0.0
        %1719 = vmatprep.subr.mxu0 0.0
        %1720 = vmatpush1.msra.mxu0 0.0
        %1721 = vmatprep.subr.mxu0 0.0
        %1722 = vmatpush1.msra.mxu0 0.0
        %1723 = vmatprep.subr.mxu0 0.0
        %1724 = vmatpush1.msra.mxu0 0.0
        %1725 = vmatprep.subr.mxu0 0.0
        %1726 = vmatpush1.msra.mxu0 0.0
        %1727 = vmatprep.subr.mxu0 0.0
        %1728 = vmatpush1.msra.mxu0 0.0
        %1729 = vmatprep.subr.mxu0 0.0
        %1730 = vmatpush1.msra.mxu0 0.0
        %1731 = vmatprep.subr.mxu0 0.0
        %1732 = vmatpush1.msra.mxu0 0.0
        %1733 = vmatprep.subr.mxu0 0.0
        %1734 = vmatpush1.msra.mxu0 0.0
        %1735 = vmatprep.subr.mxu0 0.0
        %1736 = vmatpush1.msra.mxu0 0.0
        %1737 = vmatprep.subr.mxu0 0.0
        %1738 = vmatpush1.msra.mxu0 0.0
        %1739 = vmatprep.subr.mxu0 0.0
        %1740 = vmatpush1.msra.mxu0 0.0
        %1741 = vmatprep.subr.mxu0 0.0
        %1742 = vmatpush1.msra.mxu0 0.0
        %1743 = vmatprep.subr.mxu0 0.0
        %1744 = vmatpush1.msra.mxu0 0.0
        %1745 = vmatprep.mubr.f32.mxu0 0.0
        %v1746 = vand.u32 %v1598, 4294901760
        %1747 = vmatmul.mubr.f32.gmra.mrb[0].mxu0 %v1746
        %v1748 = vpop.f32.mrb[0].mxu0
        %v1749 = vadd.f32 %v1673, %v1748
        %v1750 = vpop.f32.mrb[0].mxu0
        %1751 = vdwg.mxu0
        %1752 = vmatprep.subr.mxu0 0.0
        %v1753 = vand.u32 %v1020, 4294901760
        %v1754 = vsub.f32 %v1020, %v1753
        %1755 = vmatpush1.msra.mxu0 %v1754
        %1756 = vmatprep.subr.mxu0 0.0
        %1757 = vmatpush1.msra.mxu0 0.0
        %1758 = vmatprep.subr.mxu0 0.0
        %1759 = vmatpush1.msra.mxu0 0.0
        %1760 = vmatprep.subr.mxu0 0.0
        %1761 = vmatpush1.msra.mxu0 0.0
        %1762 = vmatprep.subr.mxu0 0.0
        %1763 = vmatpush1.msra.mxu0 0.0
        %1764 = vmatprep.subr.mxu0 0.0
        %1765 = vmatpush1.msra.mxu0 0.0
        %1766 = vmatprep.subr.mxu0 0.0
        %1767 = vmatpush1.msra.mxu0 0.0
        %1768 = vmatprep.subr.mxu0 0.0
        %1769 = vmatpush1.msra.mxu0 0.0
        %1770 = vmatprep.subr.mxu0 0.0
        %1771 = vmatpush1.msra.mxu0 0.0
        %1772 = vmatprep.subr.mxu0 0.0
        %1773 = vmatpush1.msra.mxu0 0.0
        %1774 = vmatprep.subr.mxu0 0.0
        %1775 = vmatpush1.msra.mxu0 0.0
        %1776 = vmatprep.subr.mxu0 0.0
        %1777 = vmatpush1.msra.mxu0 0.0
        %1778 = vmatprep.subr.mxu0 0.0
        %1779 = vmatpush1.msra.mxu0 0.0
        %1780 = vmatprep.subr.mxu0 0.0
        %1781 = vmatpush1.msra.mxu0 0.0
        %1782 = vmatprep.subr.mxu0 0.0
        %1783 = vmatpush1.msra.mxu0 0.0
        %1784 = vmatprep.subr.mxu0 0.0
        %1785 = vmatpush1.msra.mxu0 0.0
        %1786 = vmatprep.subr.mxu0 0.0
        %1787 = vmatpush1.msra.mxu0 0.0
        %1788 = vmatprep.subr.mxu0 0.0
        %1789 = vmatpush1.msra.mxu0 0.0
        %1790 = vmatprep.subr.mxu0 0.0
        %1791 = vmatpush1.msra.mxu0 0.0
        %1792 = vmatprep.subr.mxu0 0.0
        %1793 = vmatpush1.msra.mxu0 0.0
        %1794 = vmatprep.subr.mxu0 0.0
        %1795 = vmatpush1.msra.mxu0 0.0
        %1796 = vmatprep.subr.mxu0 0.0
        %1797 = vmatpush1.msra.mxu0 0.0
        %1798 = vmatprep.subr.mxu0 0.0
        %1799 = vmatpush1.msra.mxu0 0.0
        %1800 = vmatprep.subr.mxu0 0.0
        %1801 = vmatpush1.msra.mxu0 0.0
        %1802 = vmatprep.subr.mxu0 0.0
        %1803 = vmatpush1.msra.mxu0 0.0
        %1804 = vmatprep.subr.mxu0 0.0
        %1805 = vmatpush1.msra.mxu0 0.0
        %1806 = vmatprep.subr.mxu0 0.0
        %1807 = vmatpush1.msra.mxu0 0.0
        %1808 = vmatprep.subr.mxu0 0.0
        %1809 = vmatpush1.msra.mxu0 0.0
        %1810 = vmatprep.subr.mxu0 0.0
        %1811 = vmatpush1.msra.mxu0 0.0
        %1812 = vmatprep.subr.mxu0 0.0
        %1813 = vmatpush1.msra.mxu0 0.0
        %1814 = vmatprep.subr.mxu0 0.0
        %1815 = vmatpush1.msra.mxu0 0.0
        %1816 = vmatprep.subr.mxu0 0.0
        %1817 = vmatpush1.msra.mxu0 0.0
        %1818 = vmatprep.mubr.f32.mxu0 0.0
        %v1819 = vand.u32 %v1598, 4294901760
        %v1820 = vsub.f32 %v1598, %v1819
        %1821 = vmatmul.mubr.f32.gmra.mrb[0].mxu0 %v1820
        %v1822 = vpop.f32.mrb[0].mxu0
        %v1823 = vadd.f32 %v1749, %v1822
        %v1824 = vpop.f32.mrb[0].mxu0
        %1825 = vdwg.mxu0
        %1826 = vmatprep.subr.mxu0 0.0
        %v1827 = vand.u32 %v1020, 4294901760
        %1828 = vmatpush1.msra.mxu0 %v1827
        %1829 = vmatprep.subr.mxu0 0.0
        %1830 = vmatpush1.msra.mxu0 0.0
        %1831 = vmatprep.subr.mxu0 0.0
        %1832 = vmatpush1.msra.mxu0 0.0
        %1833 = vmatprep.subr.mxu0 0.0
        %1834 = vmatpush1.msra.mxu0 0.0
        %1835 = vmatprep.subr.mxu0 0.0
        %1836 = vmatpush1.msra.mxu0 0.0
        %1837 = vmatprep.subr.mxu0 0.0
        %1838 = vmatpush1.msra.mxu0 0.0
        %1839 = vmatprep.subr.mxu0 0.0
        %1840 = vmatpush1.msra.mxu0 0.0
        %1841 = vmatprep.subr.mxu0 0.0
        %1842 = vmatpush1.msra.mxu0 0.0
        %1843 = vmatprep.subr.mxu0 0.0
        %1844 = vmatpush1.msra.mxu0 0.0
        %1845 = vmatprep.subr.mxu0 0.0
        %1846 = vmatpush1.msra.mxu0 0.0
        %1847 = vmatprep.subr.mxu0 0.0
        %1848 = vmatpush1.msra.mxu0 0.0
        %1849 = vmatprep.subr.mxu0 0.0
        %1850 = vmatpush1.msra.mxu0 0.0
        %1851 = vmatprep.subr.mxu0 0.0
        %1852 = vmatpush1.msra.mxu0 0.0
        %1853 = vmatprep.subr.mxu0 0.0
        %1854 = vmatpush1.msra.mxu0 0.0
        %1855 = vmatprep.subr.mxu0 0.0
        %1856 = vmatpush1.msra.mxu0 0.0
        %1857 = vmatprep.subr.mxu0 0.0
        %1858 = vmatpush1.msra.mxu0 0.0
        %1859 = vmatprep.subr.mxu0 0.0
        %1860 = vmatpush1.msra.mxu0 0.0
        %1861 = vmatprep.subr.mxu0 0.0
        %1862 = vmatpush1.msra.mxu0 0.0
        %1863 = vmatprep.subr.mxu0 0.0
        %1864 = vmatpush1.msra.mxu0 0.0
        %1865 = vmatprep.subr.mxu0 0.0
        %1866 = vmatpush1.msra.mxu0 0.0
        %1867 = vmatprep.subr.mxu0 0.0
        %1868 = vmatpush1.msra.mxu0 0.0
        %1869 = vmatprep.subr.mxu0 0.0
        %1870 = vmatpush1.msra.mxu0 0.0
        %1871 = vmatprep.subr.mxu0 0.0
        %1872 = vmatpush1.msra.mxu0 0.0
        %1873 = vmatprep.subr.mxu0 0.0
        %1874 = vmatpush1.msra.mxu0 0.0
        %1875 = vmatprep.subr.mxu0 0.0
        %1876 = vmatpush1.msra.mxu0 0.0
        %1877 = vmatprep.subr.mxu0 0.0
        %1878 = vmatpush1.msra.mxu0 0.0
        %1879 = vmatprep.subr.mxu0 0.0
        %1880 = vmatpush1.msra.mxu0 0.0
        %1881 = vmatprep.subr.mxu0 0.0
        %1882 = vmatpush1.msra.mxu0 0.0
        %1883 = vmatprep.subr.mxu0 0.0
        %1884 = vmatpush1.msra.mxu0 0.0
        %1885 = vmatprep.subr.mxu0 0.0
        %1886 = vmatpush1.msra.mxu0 0.0
        %1887 = vmatprep.subr.mxu0 0.0
        %1888 = vmatpush1.msra.mxu0 0.0
        %1889 = vmatprep.subr.mxu0 0.0
        %1890 = vmatpush1.msra.mxu0 0.0
        %1891 = vmatprep.mubr.f32.mxu0 0.0
        %v1892 = vand.u32 %v1598, 4294901760
        %v1893 = vsub.f32 %v1598, %v1892
        %v1894 = vand.u32 %v1893, 4294901760
        %1895 = vmatmul.mubr.f32.gmra.mrb[0].mxu0 %v1894
        %v1896 = vpop.f32.mrb[0].mxu0
        %v1897 = vadd.f32 %v1823, %v1896
        %v1898 = vpop.f32.mrb[0].mxu0
        %1899 = vdwg.mxu0
        %1900 = vmatprep.subr.mxu0 0.0
        %v1901 = vand.u32 %v1020, 4294901760
        %v1902 = vsub.f32 %v1020, %v1901
        %v1903 = vand.u32 %v1902, 4294901760
        %1904 = vmatpush1.msra.mxu0 %v1903
        %1905 = vmatprep.subr.mxu0 0.0
        %1906 = vmatpush1.msra.mxu0 0.0
        %1907 = vmatprep.subr.mxu0 0.0
        %1908 = vmatpush1.msra.mxu0 0.0
        %1909 = vmatprep.subr.mxu0 0.0
        %1910 = vmatpush1.msra.mxu0 0.0
        %1911 = vmatprep.subr.mxu0 0.0
        %1912 = vmatpush1.msra.mxu0 0.0
        %1913 = vmatprep.subr.mxu0 0.0
        %1914 = vmatpush1.msra.mxu0 0.0
        %1915 = vmatprep.subr.mxu0 0.0
        %1916 = vmatpush1.msra.mxu0 0.0
        %1917 = vmatprep.subr.mxu0 0.0
        %1918 = vmatpush1.msra.mxu0 0.0
        %1919 = vmatprep.subr.mxu0 0.0
        %1920 = vmatpush1.msra.mxu0 0.0
        %1921 = vmatprep.subr.mxu0 0.0
        %1922 = vmatpush1.msra.mxu0 0.0
        %1923 = vmatprep.subr.mxu0 0.0
        %1924 = vmatpush1.msra.mxu0 0.0
        %1925 = vmatprep.subr.mxu0 0.0
        %1926 = vmatpush1.msra.mxu0 0.0
        %1927 = vmatprep.subr.mxu0 0.0
        %1928 = vmatpush1.msra.mxu0 0.0
        %1929 = vmatprep.subr.mxu0 0.0
        %1930 = vmatpush1.msra.mxu0 0.0
        %1931 = vmatprep.subr.mxu0 0.0
        %1932 = vmatpush1.msra.mxu0 0.0
        %1933 = vmatprep.subr.mxu0 0.0
        %1934 = vmatpush1.msra.mxu0 0.0
        %1935 = vmatprep.subr.mxu0 0.0
        %1936 = vmatpush1.msra.mxu0 0.0
        %1937 = vmatprep.subr.mxu0 0.0
        %1938 = vmatpush1.msra.mxu0 0.0
        %1939 = vmatprep.subr.mxu0 0.0
        %1940 = vmatpush1.msra.mxu0 0.0
        %1941 = vmatprep.subr.mxu0 0.0
        %1942 = vmatpush1.msra.mxu0 0.0
        %1943 = vmatprep.subr.mxu0 0.0
        %1944 = vmatpush1.msra.mxu0 0.0
        %1945 = vmatprep.subr.mxu0 0.0
        %1946 = vmatpush1.msra.mxu0 0.0
        %1947 = vmatprep.subr.mxu0 0.0
        %1948 = vmatpush1.msra.mxu0 0.0
        %1949 = vmatprep.subr.mxu0 0.0
        %1950 = vmatpush1.msra.mxu0 0.0
        %1951 = vmatprep.subr.mxu0 0.0
        %1952 = vmatpush1.msra.mxu0 0.0
        %1953 = vmatprep.subr.mxu0 0.0
        %1954 = vmatpush1.msra.mxu0 0.0
        %1955 = vmatprep.subr.mxu0 0.0
        %1956 = vmatpush1.msra.mxu0 0.0
        %1957 = vmatprep.subr.mxu0 0.0
        %1958 = vmatpush1.msra.mxu0 0.0
        %1959 = vmatprep.subr.mxu0 0.0
        %1960 = vmatpush1.msra.mxu0 0.0
        %1961 = vmatprep.subr.mxu0 0.0
        %1962 = vmatpush1.msra.mxu0 0.0
        %1963 = vmatprep.subr.mxu0 0.0
        %1964 = vmatpush1.msra.mxu0 0.0
        %1965 = vmatprep.subr.mxu0 0.0
        %1966 = vmatpush1.msra.mxu0 0.0
        %1967 = vmatprep.mubr.f32.mxu0 0.0
        %v1968 = vand.u32 %v1598, 4294901760
        %1969 = vmatmul.mubr.f32.gmra.mrb[0].mxu0 %v1968
        %v1970 = vpop.f32.mrb[0].mxu0
        %v1971 = vadd.f32 %v1897, %v1970
        %v1972 = vpop.f32.mrb[0].mxu0
        %1973 = vdwg.mxu0
        %1974 = vmatprep.subr.mxu0 0.0
        %v1975 = vand.u32 %v1020, 4294901760
        %1976 = vmatpush1.msra.mxu0 %v1975
        %1977 = vmatprep.subr.mxu0 0.0
        %1978 = vmatpush1.msra.mxu0 0.0
        %1979 = vmatprep.subr.mxu0 0.0
        %1980 = vmatpush1.msra.mxu0 0.0
        %1981 = vmatprep.subr.mxu0 0.0
        %1982 = vmatpush1.msra.mxu0 0.0
        %1983 = vmatprep.subr.mxu0 0.0
        %1984 = vmatpush1.msra.mxu0 0.0
        %1985 = vmatprep.subr.mxu0 0.0
        %1986 = vmatpush1.msra.mxu0 0.0
        %1987 = vmatprep.subr.mxu0 0.0
        %1988 = vmatpush1.msra.mxu0 0.0
        %1989 = vmatprep.subr.mxu0 0.0
        %1990 = vmatpush1.msra.mxu0 0.0
        %1991 = vmatprep.subr.mxu0 0.0
        %1992 = vmatpush1.msra.mxu0 0.0
        %1993 = vmatprep.subr.mxu0 0.0
        %1994 = vmatpush1.msra.mxu0 0.0
        %1995 = vmatprep.subr.mxu0 0.0
        %1996 = vmatpush1.msra.mxu0 0.0
        %1997 = vmatprep.subr.mxu0 0.0
        %1998 = vmatpush1.msra.mxu0 0.0
        %1999 = vmatprep.subr.mxu0 0.0
        %2000 = vmatpush1.msra.mxu0 0.0
        %2001 = vmatprep.subr.mxu0 0.0
        %2002 = vmatpush1.msra.mxu0 0.0
        %2003 = vmatprep.subr.mxu0 0.0
        %2004 = vmatpush1.msra.mxu0 0.0
        %2005 = vmatprep.subr.mxu0 0.0
        %2006 = vmatpush1.msra.mxu0 0.0
        %2007 = vmatprep.subr.mxu0 0.0
        %2008 = vmatpush1.msra.mxu0 0.0
        %2009 = vmatprep.subr.mxu0 0.0
        %2010 = vmatpush1.msra.mxu0 0.0
        %2011 = vmatprep.subr.mxu0 0.0
        %2012 = vmatpush1.msra.mxu0 0.0
        %2013 = vmatprep.subr.mxu0 0.0
        %2014 = vmatpush1.msra.mxu0 0.0
        %2015 = vmatprep.subr.mxu0 0.0
        %2016 = vmatpush1.msra.mxu0 0.0
        %2017 = vmatprep.subr.mxu0 0.0
        %2018 = vmatpush1.msra.mxu0 0.0
        %2019 = vmatprep.subr.mxu0 0.0
        %2020 = vmatpush1.msra.mxu0 0.0
        %2021 = vmatprep.subr.mxu0 0.0
        %2022 = vmatpush1.msra.mxu0 0.0
        %2023 = vmatprep.subr.mxu0 0.0
        %2024 = vmatpush1.msra.mxu0 0.0
        %2025 = vmatprep.subr.mxu0 0.0
        %2026 = vmatpush1.msra.mxu0 0.0
        %2027 = vmatprep.subr.mxu0 0.0
        %2028 = vmatpush1.msra.mxu0 0.0
        %2029 = vmatprep.subr.mxu0 0.0
        %2030 = vmatpush1.msra.mxu0 0.0
        %2031 = vmatprep.subr.mxu0 0.0
        %2032 = vmatpush1.msra.mxu0 0.0
        %2033 = vmatprep.subr.mxu0 0.0
        %2034 = vmatpush1.msra.mxu0 0.0
        %2035 = vmatprep.subr.mxu0 0.0
        %2036 = vmatpush1.msra.mxu0 0.0
        %2037 = vmatprep.subr.mxu0 0.0
        %2038 = vmatpush1.msra.mxu0 0.0
        %2039 = vmatprep.mubr.f32.mxu0 0.0
        %v2040 = vand.u32 %v1598, 4294901760
        %2041 = vmatmul.mubr.f32.gmra.mrb[0].mxu0 %v2040
        %v2042 = vpop.f32.mrb[0].mxu0
        %v2043 = vadd.f32 %v1971, %v2042
        %v2044 = vpop.f32.mrb[0].mxu0
        %2045 = vdwg.mxu0
        %v2046 = vand.u32 2147483647, %v986
        %vm2047 = vcmp.le.f32.partialorder %v2046, 0.7853982
        %vm2048 = vcmp.lt.s32.totalorder %v986, 0
        %v2049 = vand.u32 %v986, 2139095040
        %v2050 = vshrl.u32 %v2049, 23
        %v2051 = vsub.s32 %v2050, 127
        %v2052 = vand.u32 2147483647, %v986
        %v2053 = vand.u32 %v2052, 8388607
        %v2054 = vor.u32 %v2053, 8388608
        %v2055 = vsub.s32 0, %v2054
        %v2056 = vadd.s32 %v2051, 1
        %vm2057 = vcmp.gt.s32.totalorder %v2056, 0
        %v2058 = vsel %vm2057, %v2056, 0
        %v2059 = vshrl.u32 %v2058, 5
        %v2060 = vand.u32 %v2058, 31
        %v2061 = vsub.s32 32, %v2060
        %v2062 = vshrl.u32 683565275, %v2061
        %v2063 = vshll.u32 683565275, %v2060
        %v2064 = vshrl.u32 2475754826, %v2061
        %v2065 = vor.u32 %v2063, %v2064
        %v2066 = vshll.u32 2475754826, %v2060
        %v2067 = vshrl.u32 2131351028, %v2061
        %v2068 = vor.u32 %v2066, %v2067
        %v2069 = vshll.u32 2131351028, %v2060
        %v2070 = vshrl.u32 2102212464, %v2061
        %v2071 = vor.u32 %v2069, %v2070
        %v2072 = vshll.u32 2102212464, %v2060
        %v2073 = vshrl.u32 920167782, %v2061
        %v2074 = vor.u32 %v2072, %v2073
        %v2075 = vshll.u32 920167782, %v2060
        %v2076 = vshrl.u32 1326507024, %v2061
        %v2077 = vor.u32 %v2075, %v2076
        %vm2078 = vcmp.lt.s32.totalorder %v2059, 1
        %vm2079 = vcmp.lt.s32.totalorder %v2059, 2
        %vm2080 = vcmp.lt.s32.totalorder %v2059, 3
        %vm2081 = vcmp.lt.s32.totalorder %v2059, 4
        %v2082 = vsel %vm2078, %v2062, %v2065
        %v2083 = vsel %vm2081, %v2071, 2102212464
        %v2084 = vsel %vm2080, %v2068, %v2083
        %v2085 = vsel %vm2079, %v2082, %v2084
        %v2086 = vsel %vm2078, %v2065, %v2068
        %v2087 = vsel %vm2081, %v2074, 920167782
        %v2088 = vsel %vm2080, %v2071, %v2087
        %v2089 = vsel %vm2079, %v2086, %v2088
        %v2090 = vsel %vm2078, %v2068, %v2071
        %v2091 = vsel %vm2081, %v2077, 1326507024
        %v2092 = vsel %vm2080, %v2074, %v2091
        %v2093 = vsel %vm2079, %v2090, %v2092
        %v2094 = vshll.u32 %v2054, 8
        %v2095 = vmul.u32.u64.compose %v2094, %v2093
        %v2096 = vextract.low.u32 %v2095
        %v2097 = vextract.high.u32 %v2095
        %v2098 = vmul.u32.u64.compose %v2094, %v2089
        %v2099 = vextract.low.u32 %v2098
        %v2100 = vextract.high.u32 %v2098
        %v2101 = vmul.u32 %v2094, %v2085
        %v2102 = vadd.s32 %v2097, %v2099
        %vm2103 = vc.u32 %v2097, %v2099
        %v2104 = vadd.s32 %v2100, 1
        %v2105 = vsel %vm2103, %v2104, %v2100
        %v2106 = vadd.s32 %v2101, %v2105
        %v2107 = vadd.s32 %v2106, 536870912
        %v2108 = vshrl.u32 %v2107, 30
        %v2109 = vshll.u32 %v2108, 30
        %v2110 = vsub.s32 %v2106, %v2109
        %vm2111 = vcmp.lt.s32.totalorder %v2110, 0
        %v2112 = vsub.s32 0, %v2110
        %v2113 = vsel %vm2111, %v2112, %v2110
        %v2114 = vclz %v2113
        %v2115 = vsub.s32 %v2114, 2
        %vm2116 = vcmp.gt.s32.totalorder 0, %v2115
        %v2117 = vsel %vm2116, 0, %v2115
        %v2118 = vsub.s32 32, %v2117
        %v2119 = vshll.u32 %v2110, %v2117
        %v2120 = vshrl.u32 %v2102, %v2118
        %v2121 = vor.u32 %v2119, %v2120
        %v2122 = vsub.s32 4294967266, %v2117
        %v2123 = vadd.s32 %v2122, 127
        %v2124 = vshll.u32 %v2123, 23
        %v2125 = vor.u32 4788187, %v2124
        %v2126 = vand.u32 2147483647, %v2125
        %v2128 = vcvt.s32.f32 %v2121
        %v2129 = vmul.f32 %v2128, %v2126
        %v2130 = vxor.u32 %v2129, 2147483648
        %v2131 = vsel %vm2048, %v2130, %v2129
        %v2132 = vsub.s32 4, %v2108
        %v2133 = vsel %vm2048, %v2132, %v2108
        %v2134 = vsel %vm2047, %v986, %v2131
        %v2135 = vsel %vm2047, 0, %v2133
        %v2136 = vcosq.f32.pop %v2134
        %v2137 = vsinq.f32.pop %v2134
        %vm2138 = vweird.f32 %v986
        %v2139 = vadd.s32 %v2135, 3
        %v2140 = vand.u32 %v2139, 3
        %vm2141 = vcmp.lt.s32.totalorder %v2140, 2
        %vm2142 = vcmp.eq.s32.totalorder %v2140, 0
        %v2143 = vxor.u32 %v2137, 2147483648
        %v2144 = vsel %vm2142, %v2136, %v2143
        %vm2145 = vcmp.eq.s32.totalorder %v2140, 2
        %v2146 = vxor.u32 %v2136, 2147483648
        %v2147 = vsel %vm2145, %v2146, %v2137
        %v2148 = vsel %vm2141, %v2144, %v2147
        %v2149 = vsel %vm2138, nan, %v2148
        %v2150 = vand.u32 2147483647, %v992
        %vm2151 = vcmp.le.f32.partialorder %v2150, 0.7853982
        %vm2152 = vcmp.lt.s32.totalorder %v992, 0
        %v2153 = vand.u32 %v992, 2139095040
        %v2154 = vshrl.u32 %v2153, 23
        %v2155 = vsub.s32 %v2154, 127
        %v2156 = vand.u32 2147483647, %v992
        %v2157 = vand.u32 %v2156, 8388607
        %v2158 = vor.u32 %v2157, 8388608
        %v2159 = vsub.s32 0, %v2158
        %v2160 = vadd.s32 %v2155, 1
        %vm2161 = vcmp.gt.s32.totalorder %v2160, 0
        %v2162 = vsel %vm2161, %v2160, 0
        %v2163 = vshrl.u32 %v2162, 5
        %v2164 = vand.u32 %v2162, 31
        %v2165 = vsub.s32 32, %v2164
        %v2166 = vshrl.u32 683565275, %v2165
        %v2167 = vshll.u32 683565275, %v2164
        %v2168 = vshrl.u32 2475754826, %v2165
        %v2169 = vor.u32 %v2167, %v2168
        %v2170 = vshll.u32 2475754826, %v2164
        %v2171 = vshrl.u32 2131351028, %v2165
        %v2172 = vor.u32 %v2170, %v2171
        %v2173 = vshll.u32 2131351028, %v2164
        %v2174 = vshrl.u32 2102212464, %v2165
        %v2175 = vor.u32 %v2173, %v2174
        %v2176 = vshll.u32 2102212464, %v2164
        %v2177 = vshrl.u32 920167782, %v2165
        %v2178 = vor.u32 %v2176, %v2177
        %v2179 = vshll.u32 920167782, %v2164
        %v2180 = vshrl.u32 1326507024, %v2165
        %v2181 = vor.u32 %v2179, %v2180
        %vm2182 = vcmp.lt.s32.totalorder %v2163, 1
        %vm2183 = vcmp.lt.s32.totalorder %v2163, 2
        %vm2184 = vcmp.lt.s32.totalorder %v2163, 3
        %vm2185 = vcmp.lt.s32.totalorder %v2163, 4
        %v2186 = vsel %vm2182, %v2166, %v2169
        %v2187 = vsel %vm2185, %v2175, 2102212464
        %v2188 = vsel %vm2184, %v2172, %v2187
        %v2189 = vsel %vm2183, %v2186, %v2188
        %v2190 = vsel %vm2182, %v2169, %v2172
        %v2191 = vsel %vm2185, %v2178, 920167782
        %v2192 = vsel %vm2184, %v2175, %v2191
        %v2193 = vsel %vm2183, %v2190, %v2192
        %v2194 = vsel %vm2182, %v2172, %v2175
        %v2195 = vsel %vm2185, %v2181, 1326507024
        %v2196 = vsel %vm2184, %v2178, %v2195
        %v2197 = vsel %vm2183, %v2194, %v2196
        %v2198 = vshll.u32 %v2158, 8
        %v2199 = vmul.u32.u64.compose %v2198, %v2197
        %v2200 = vextract.low.u32 %v2199
        %v2201 = vextract.high.u32 %v2199
        %v2202 = vmul.u32.u64.compose %v2198, %v2193
        %v2203 = vextract.low.u32 %v2202
        %v2204 = vextract.high.u32 %v2202
        %v2205 = vmul.u32 %v2198, %v2189
        %v2206 = vadd.s32 %v2201, %v2203
        %vm2207 = vc.u32 %v2201, %v2203
        %v2208 = vadd.s32 %v2204, 1
        %v2209 = vsel %vm2207, %v2208, %v2204
        %v2210 = vadd.s32 %v2205, %v2209
        %v2211 = vadd.s32 %v2210, 536870912
        %v2212 = vshrl.u32 %v2211, 30
        %v2213 = vshll.u32 %v2212, 30
        %v2214 = vsub.s32 %v2210, %v2213
        %vm2215 = vcmp.lt.s32.totalorder %v2214, 0
        %v2216 = vsub.s32 0, %v2214
        %v2217 = vsel %vm2215, %v2216, %v2214
        %v2218 = vclz %v2217
        %v2219 = vsub.s32 %v2218, 2
        %vm2220 = vcmp.gt.s32.totalorder 0, %v2219
        %v2221 = vsel %vm2220, 0, %v2219
        %v2222 = vsub.s32 32, %v2221
        %v2223 = vshll.u32 %v2214, %v2221
        %v2224 = vshrl.u32 %v2206, %v2222
        %v2225 = vor.u32 %v2223, %v2224
        %v2226 = vsub.s32 4294967266, %v2221
        %v2227 = vadd.s32 %v2226, 127
        %v2228 = vshll.u32 %v2227, 23
        %v2229 = vor.u32 4788187, %v2228
        %v2230 = vand.u32 2147483647, %v2229
        %v2232 = vcvt.s32.f32 %v2225
        %v2233 = vmul.f32 %v2232, %v2230
        %v2234 = vxor.u32 %v2233, 2147483648
        %v2235 = vsel %vm2152, %v2234, %v2233
        %v2236 = vsub.s32 4, %v2212
        %v2237 = vsel %vm2152, %v2236, %v2212
        %v2238 = vsel %vm2151, %v992, %v2235
        %v2239 = vsel %vm2151, 0, %v2237
        %v2240 = vcosq.f32.pop %v2238
        %v2241 = vsinq.f32.pop %v2238
        %vm2242 = vweird.f32 %v992
        %v2243 = vadd.s32 %v2239, 3
        %v2244 = vand.u32 %v2243, 3
        %vm2245 = vcmp.lt.s32.totalorder %v2244, 2
        %vm2246 = vcmp.eq.s32.totalorder %v2244, 0
        %v2247 = vxor.u32 %v2241, 2147483648
        %v2248 = vsel %vm2246, %v2240, %v2247
        %vm2249 = vcmp.eq.s32.totalorder %v2244, 2
        %v2250 = vxor.u32 %v2240, 2147483648
        %v2251 = vsel %vm2249, %v2250, %v2241
        %v2252 = vsel %vm2245, %v2248, %v2251
        %v2253 = vsel %vm2242, nan, %v2252
        %v2254 = vand.u32 2147483647, %v998
        %vm2255 = vcmp.le.f32.partialorder %v2254, 0.7853982
        %vm2256 = vcmp.lt.s32.totalorder %v998, 0
        %v2257 = vand.u32 %v998, 2139095040
        %v2258 = vshrl.u32 %v2257, 23
        %v2259 = vsub.s32 %v2258, 127
        %v2260 = vand.u32 2147483647, %v998
        %v2261 = vand.u32 %v2260, 8388607
        %v2262 = vor.u32 %v2261, 8388608
        %v2263 = vsub.s32 0, %v2262
        %v2264 = vadd.s32 %v2259, 1
        %vm2265 = vcmp.gt.s32.totalorder %v2264, 0
        %v2266 = vsel %vm2265, %v2264, 0
        %v2267 = vshrl.u32 %v2266, 5
        %v2268 = vand.u32 %v2266, 31
        %v2269 = vsub.s32 32, %v2268
        %v2270 = vshrl.u32 683565275, %v2269
        %v2271 = vshll.u32 683565275, %v2268
        %v2272 = vshrl.u32 2475754826, %v2269
        %v2273 = vor.u32 %v2271, %v2272
        %v2274 = vshll.u32 2475754826, %v2268
        %v2275 = vshrl.u32 2131351028, %v2269
        %v2276 = vor.u32 %v2274, %v2275
        %v2277 = vshll.u32 2131351028, %v2268
        %v2278 = vshrl.u32 2102212464, %v2269
        %v2279 = vor.u32 %v2277, %v2278
        %v2280 = vshll.u32 2102212464, %v2268
        %v2281 = vshrl.u32 920167782, %v2269
        %v2282 = vor.u32 %v2280, %v2281
        %v2283 = vshll.u32 920167782, %v2268
        %v2284 = vshrl.u32 1326507024, %v2269
        %v2285 = vor.u32 %v2283, %v2284
        %vm2286 = vcmp.lt.s32.totalorder %v2267, 1
        %vm2287 = vcmp.lt.s32.totalorder %v2267, 2
        %vm2288 = vcmp.lt.s32.totalorder %v2267, 3
        %vm2289 = vcmp.lt.s32.totalorder %v2267, 4
        %v2290 = vsel %vm2286, %v2270, %v2273
        %v2291 = vsel %vm2289, %v2279, 2102212464
        %v2292 = vsel %vm2288, %v2276, %v2291
        %v2293 = vsel %vm2287, %v2290, %v2292
        %v2294 = vsel %vm2286, %v2273, %v2276
        %v2295 = vsel %vm2289, %v2282, 920167782
        %v2296 = vsel %vm2288, %v2279, %v2295
        %v2297 = vsel %vm2287, %v2294, %v2296
        %v2298 = vsel %vm2286, %v2276, %v2279
        %v2299 = vsel %vm2289, %v2285, 1326507024
        %v2300 = vsel %vm2288, %v2282, %v2299
        %v2301 = vsel %vm2287, %v2298, %v2300
        %v2302 = vshll.u32 %v2262, 8
        %v2303 = vmul.u32.u64.compose %v2302, %v2301
        %v2304 = vextract.low.u32 %v2303
        %v2305 = vextract.high.u32 %v2303
        %v2306 = vmul.u32.u64.compose %v2302, %v2297
        %v2307 = vextract.low.u32 %v2306
        %v2308 = vextract.high.u32 %v2306
        %v2309 = vmul.u32 %v2302, %v2293
        %v2310 = vadd.s32 %v2305, %v2307
        %vm2311 = vc.u32 %v2305, %v2307
        %v2312 = vadd.s32 %v2308, 1
        %v2313 = vsel %vm2311, %v2312, %v2308
        %v2314 = vadd.s32 %v2309, %v2313
        %v2315 = vadd.s32 %v2314, 536870912
        %v2316 = vshrl.u32 %v2315, 30
        %v2317 = vshll.u32 %v2316, 30
        %v2318 = vsub.s32 %v2314, %v2317
        %vm2319 = vcmp.lt.s32.totalorder %v2318, 0
        %v2320 = vsub.s32 0, %v2318
        %v2321 = vsel %vm2319, %v2320, %v2318
        %v2322 = vclz %v2321
        %v2323 = vsub.s32 %v2322, 2
        %vm2324 = vcmp.gt.s32.totalorder 0, %v2323
        %v2325 = vsel %vm2324, 0, %v2323
        %v2326 = vsub.s32 32, %v2325
        %v2327 = vshll.u32 %v2318, %v2325
        %v2328 = vshrl.u32 %v2310, %v2326
        %v2329 = vor.u32 %v2327, %v2328
        %v2330 = vsub.s32 4294967266, %v2325
        %v2331 = vadd.s32 %v2330, 127
        %v2332 = vshll.u32 %v2331, 23
        %v2333 = vor.u32 4788187, %v2332
        %v2334 = vand.u32 2147483647, %v2333
        %v2336 = vcvt.s32.f32 %v2329
        %v2337 = vmul.f32 %v2336, %v2334
        %v2338 = vxor.u32 %v2337, 2147483648
        %v2339 = vsel %vm2256, %v2338, %v2337
        %v2340 = vsub.s32 4, %v2316
        %v2341 = vsel %vm2256, %v2340, %v2316
        %v2342 = vsel %vm2255, %v998, %v2339
        %v2343 = vsel %vm2255, 0, %v2341
        %v2344 = vcosq.f32.pop %v2342
        %v2345 = vsinq.f32.pop %v2342
        %vm2346 = vweird.f32 %v998
        %v2347 = vadd.s32 %v2343, 3
        %v2348 = vand.u32 %v2347, 3
        %vm2349 = vcmp.lt.s32.totalorder %v2348, 2
        %vm2350 = vcmp.eq.s32.totalorder %v2348, 0
        %v2351 = vxor.u32 %v2345, 2147483648
        %v2352 = vsel %vm2350, %v2344, %v2351
        %vm2353 = vcmp.eq.s32.totalorder %v2348, 2
        %v2354 = vxor.u32 %v2344, 2147483648
        %v2355 = vsel %vm2353, %v2354, %v2345
        %v2356 = vsel %vm2349, %v2352, %v2355
        %v2357 = vsel %vm2346, nan, %v2356
        %v2358 = vand.u32 2147483647, %v1004
        %vm2359 = vcmp.le.f32.partialorder %v2358, 0.7853982
        %vm2360 = vcmp.lt.s32.totalorder %v1004, 0
        %v2361 = vand.u32 %v1004, 2139095040
        %v2362 = vshrl.u32 %v2361, 23
        %v2363 = vsub.s32 %v2362, 127
        %v2364 = vand.u32 2147483647, %v1004
        %v2365 = vand.u32 %v2364, 8388607
        %v2366 = vor.u32 %v2365, 8388608
        %v2367 = vsub.s32 0, %v2366
        %v2368 = vadd.s32 %v2363, 1
        %vm2369 = vcmp.gt.s32.totalorder %v2368, 0
        %v2370 = vsel %vm2369, %v2368, 0
        %v2371 = vshrl.u32 %v2370, 5
        %v2372 = vand.u32 %v2370, 31
        %v2373 = vsub.s32 32, %v2372
        %v2374 = vshrl.u32 683565275, %v2373
        %v2375 = vshll.u32 683565275, %v2372
        %v2376 = vshrl.u32 2475754826, %v2373
        %v2377 = vor.u32 %v2375, %v2376
        %v2378 = vshll.u32 2475754826, %v2372
        %v2379 = vshrl.u32 2131351028, %v2373
        %v2380 = vor.u32 %v2378, %v2379
        %v2381 = vshll.u32 2131351028, %v2372
        %v2382 = vshrl.u32 2102212464, %v2373
        %v2383 = vor.u32 %v2381, %v2382
        %v2384 = vshll.u32 2102212464, %v2372
        %v2385 = vshrl.u32 920167782, %v2373
        %v2386 = vor.u32 %v2384, %v2385
        %v2387 = vshll.u32 920167782, %v2372
        %v2388 = vshrl.u32 1326507024, %v2373
        %v2389 = vor.u32 %v2387, %v2388
        %vm2390 = vcmp.lt.s32.totalorder %v2371, 1
        %vm2391 = vcmp.lt.s32.totalorder %v2371, 2
        %vm2392 = vcmp.lt.s32.totalorder %v2371, 3
        %vm2393 = vcmp.lt.s32.totalorder %v2371, 4
        %v2394 = vsel %vm2390, %v2374, %v2377
        %v2395 = vsel %vm2393, %v2383, 2102212464
        %v2396 = vsel %vm2392, %v2380, %v2395
        %v2397 = vsel %vm2391, %v2394, %v2396
        %v2398 = vsel %vm2390, %v2377, %v2380
        %v2399 = vsel %vm2393, %v2386, 920167782
        %v2400 = vsel %vm2392, %v2383, %v2399
        %v2401 = vsel %vm2391, %v2398, %v2400
        %v2402 = vsel %vm2390, %v2380, %v2383
        %v2403 = vsel %vm2393, %v2389, 1326507024
        %v2404 = vsel %vm2392, %v2386, %v2403
        %v2405 = vsel %vm2391, %v2402, %v2404
        %v2406 = vshll.u32 %v2366, 8
        %v2407 = vmul.u32.u64.compose %v2406, %v2405
        %v2408 = vextract.low.u32 %v2407
        %v2409 = vextract.high.u32 %v2407
        %v2410 = vmul.u32.u64.compose %v2406, %v2401
        %v2411 = vextract.low.u32 %v2410
        %v2412 = vextract.high.u32 %v2410
        %v2413 = vmul.u32 %v2406, %v2397
        %v2414 = vadd.s32 %v2409, %v2411
        %vm2415 = vc.u32 %v2409, %v2411
        %v2416 = vadd.s32 %v2412, 1
        %v2417 = vsel %vm2415, %v2416, %v2412
        %v2418 = vadd.s32 %v2413, %v2417
        %v2419 = vadd.s32 %v2418, 536870912
        %v2420 = vshrl.u32 %v2419, 30
        %v2421 = vshll.u32 %v2420, 30
        %v2422 = vsub.s32 %v2418, %v2421
        %vm2423 = vcmp.lt.s32.totalorder %v2422, 0
        %v2424 = vsub.s32 0, %v2422
        %v2425 = vsel %vm2423, %v2424, %v2422
        %v2426 = vclz %v2425
        %v2427 = vsub.s32 %v2426, 2
        %vm2428 = vcmp.gt.s32.totalorder 0, %v2427
        %v2429 = vsel %vm2428, 0, %v2427
        %v2430 = vsub.s32 32, %v2429
        %v2431 = vshll.u32 %v2422, %v2429
        %v2432 = vshrl.u32 %v2414, %v2430
        %v2433 = vor.u32 %v2431, %v2432
        %v2434 = vsub.s32 4294967266, %v2429
        %v2435 = vadd.s32 %v2434, 127
        %v2436 = vshll.u32 %v2435, 23
        %v2437 = vor.u32 4788187, %v2436
        %v2438 = vand.u32 2147483647, %v2437
        %v2440 = vcvt.s32.f32 %v2433
        %v2441 = vmul.f32 %v2440, %v2438
        %v2442 = vxor.u32 %v2441, 2147483648
        %v2443 = vsel %vm2360, %v2442, %v2441
        %v2444 = vsub.s32 4, %v2420
        %v2445 = vsel %vm2360, %v2444, %v2420
        %v2446 = vsel %vm2359, %v1004, %v2443
        %v2447 = vsel %vm2359, 0, %v2445
        %v2448 = vcosq.f32.pop %v2446
        %v2449 = vsinq.f32.pop %v2446
        %vm2450 = vweird.f32 %v1004
        %v2451 = vadd.s32 %v2447, 3
        %v2452 = vand.u32 %v2451, 3
        %vm2453 = vcmp.lt.s32.totalorder %v2452, 2
        %vm2454 = vcmp.eq.s32.totalorder %v2452, 0
        %v2455 = vxor.u32 %v2449, 2147483648
        %v2456 = vsel %vm2454, %v2448, %v2455
        %vm2457 = vcmp.eq.s32.totalorder %v2452, 2
        %v2458 = vxor.u32 %v2448, 2147483648
        %v2459 = vsel %vm2457, %v2458, %v2449
        %v2460 = vsel %vm2453, %v2456, %v2459
        %v2461 = vsel %vm2450, nan, %v2460
        %v2462 = vmul.f32 %v2149, %v1576
        %v2463 = vmul.f32 %v2253, %v1582
        %v2464 = vmul.f32 %v2357, %v1588
        %v2465 = vmul.f32 %v2461, %v1594
        %v2466 = vadd.f32 %v2462, %v2463
        %v2467 = vrot.slane %v2466, 4
        %v2468 = vadd.f32 %v2466, %v2467
        %v2469 = vrot.slane %v2468, 2
        %v2470 = vadd.f32 %v2468, %v2469
        %v2471 = vrot.slane %v2470, 1
        %v2472 = vadd.f32 %v2470, %v2471
        %v2473 = vadd.f32 %v2464, %v2465
        %v2474 = vrot.slane %v2473, 4
        %v2475 = vadd.f32 %v2473, %v2474
        %v2476 = vrot.slane %v2475, 2
        %v2477 = vadd.f32 %v2475, %v2476
        %v2478 = vrot.slane %v2477, 1
        %v2479 = vadd.f32 %v2477, %v2478
        %v2481 = vrot.slane %v2043, 1
        %v2484 = vmul.f32 %v2472, %v2043
        %v2485 = vmul.f32 %v2479, %v2481
        %v2488 = vrot.slane %v2485, 7
        %vm2489 = vcmask 1041409
        %v2490 = vsel %vm2489, %v2488, %v2484
        %2492 = vst [vmem:[%s342] sm:$0x3] %v2490
        %s2493 = sand.u32 %s196, 1
        %s2494 = scalar_lea.sflag [#allocation3], %s2493
        %s2495 = sand.u32 %s196, 1
        %s2496 = smul.addr %s2495, 2
        %s2497 = scalar_lea.vmem [#allocation2], %s2496
        // Predicated region
        $region45: #{tpu_custom_call.1} parent=43 // pred_check
          %p2498 = pneg %p206
        $region46: #{tpu_custom_call.1} parent=43 // pred_check_branch
          %2500 = sbr.rel (%p2498) target = $region48
        $region47: #{tpu_custom_call.1} parent=43 // pred_region
          %s2502 = ssub.s32 32, 32
          %2503 = vsyncadd %s2494, %s2502
          %s2504 = smul.addr %s25, 4
          %s2505 = sadd.s32 %s24, %s2504
          %s2506 = smul.addr %s2505, 32
          %s2507 = scalar_lea.hbm %s6, %s2506
          %s2509 = sshll.u32 %s2497, 4
          %s2510 = int_to_ptr.vmem [resolvable:$true] %s2509
          %2512 = dma.vmem_to_hbm [thread:$0]  %s2510, 32, %s2507, %s2494
        $region48: #{tpu_custom_call.1} parent=43 // pred_fallthru
          _
      $region44: #{tpu_custom_call.1} parent=5 // pred_fallthru
        _
      %p2513 = scmp.le.s32.totalorder 2, %s15
      // Predicated region
      $region49: #{tpu_custom_call.1} parent=5 // pred_check
        %p2514 = pneg %p2513
      $region50: #{tpu_custom_call.1} parent=5 // pred_check_branch
        %2516 = sbr.rel (%p2514) target = $region52
      $region51: #{tpu_custom_call.1} parent=5 // pred_region
        %s2517 = ssub.s32 %s15, 2
        // Predicated region
        $region53: #{tpu_custom_call.1} parent=51 // pred_check
          %p2518 = pneg %p212
        $region54: #{tpu_custom_call.1} parent=51 // pred_check_branch
          %2520 = sbr.rel (%p2518) target = $region56
        $region55: #{tpu_custom_call.1} parent=51 // pred_region
          %s2521 = sand.u32 %s197, 1
          %s2522 = scalar_lea.sflag [#allocation3], %s2521
          %s2523 = sand.u32 %s197, 1
          %s2524 = smul.addr %s2523, 2
          %s2525 = scalar_lea.vmem [#allocation2], %s2524
          %2526 = dma.done %s2522, 32
        $region56: #{tpu_custom_call.1} parent=51 // pred_fallthru
          _
      $region52: #{tpu_custom_call.1} parent=5 // pred_fallthru
        _
    $region6: #{tpu_custom_call.1} parent=1 // loop_footer
      %s19 = sadd.s32 1, %s15
    $region7: #{tpu_custom_call.1} parent=1 // loop_footer_branch
      %14 = sbr.rel target = $region3
    $region8: #{tpu_custom_call.1} parent=1 // loop_exit
      _
    %2527 = vsyncpa [#allocation3], 1
    %s2528 = scalar_lea.sflag [#allocation3], 1
    %2529 = vsyncpa %s2528, 1

</llo_original>
